<compile_context>
chip_gen: v6e
topology: v6e:2x2x1
jax: 0.10.0
libtpu: 0.0.40
codegen_flags: <defaults>
</compile_context>

<pallas_src>
import functools
import math

import jax
import jax.numpy as jnp
from jax import lax
from jax.experimental import pallas as pl
from jax.experimental.pallas import tpu as pltpu

N_HEADS = 4
LN_EPS = 1e-5
NEG_INF = -1e30          # finite mask value (avoids inf-inf NaN hazards)
LANE = 128
VMEM_LIMIT = 48 * 1024 * 1024   # above 16/32 MiB defaults, below physical on v5e/v6e/v7x


# ---------------------------- in-kernel helpers ----------------------------

def _layer_norm(x, g, b):
    mu = jnp.mean(x, axis=-1, keepdims=True)
    var = jnp.mean((x - mu) ** 2, axis=-1, keepdims=True)
    return (x - mu) * lax.rsqrt(var + LN_EPS) * g + b


def _softmax_rows(s):
    m = jnp.max(s, axis=-1, keepdims=True)
    p = jnp.exp(s - m)
    denom = jnp.sum(p, axis=-1, keepdims=True)
    return p * pl.reciprocal(denom, approx=True)   # EUP slot, ~free vs VPU divide


def _mha_accumulate(q, k, v, wo, scale, n_heads, acc, causal_row0=None):
    """Multi-head attention with the output projection fused per head.

    q: (Lq, D) f32, k/v: (S, D) f32, wo: (D, D) bf16.  Returns
    acc + concat_h(attn_h) @ wo computed as acc + sum_h attn_h @ wo[h*E:(h+1)*E, :]
    so the result stays lane-dense (Lq, D) without concatenation / transpose.
    All MXU operands are bf16; accumulation is f32.
    """
    Lq, D = q.shape
    S = k.shape[0]
    E = D // n_heads
    qb = q.astype(jnp.bfloat16)
    kb = k.astype(jnp.bfloat16)
    vb = v.astype(jnp.bfloat16)
    if causal_row0 is not None:
        row = causal_row0 + lax.broadcasted_iota(jnp.int32, (Lq, S), 0)
        col = lax.broadcasted_iota(jnp.int32, (Lq, S), 1)
        causal_mask = col > row
    for h in range(n_heads):               # static unroll, H is small
        lo, hi = h * E, (h + 1) * E
        # (Lq, E) x (S, E) contracted over E -> (Lq, S); no explicit transpose needed.
        s = lax.dot_general(qb[:, lo:hi], kb[:, lo:hi], (((1,), (1,)), ((), ())),
                            preferred_element_type=jnp.float32) * scale
        if causal_row0 is not None:
            s = jnp.where(causal_mask, NEG_INF, s)
        p = _softmax_rows(s).astype(jnp.bfloat16)
        oh = jnp.dot(p, vb[:, lo:hi], preferred_element_type=jnp.float32)      # (Lq, E)
        acc = acc + jnp.dot(oh.astype(jnp.bfloat16), wo[lo:hi, :],             # (Lq, D)
                            preferred_element_type=jnp.float32)
    return acc


# ---------------------------- Pallas kernels ----------------------------

def _self_attn_kernel(x_ref, wqkv_ref, bqkv_ref, wo_ref, bo_ref, g_ref, b_ref,
                      o_ref, kv_scr, *, n_heads, scale, tq):
    """Fused: qkv projection + causal MHA + out-proj + residual + LayerNorm1.

    grid = (B, nq).  x_ref holds the full (L, D) row (resident across the query axis);
    the K/V projection is computed once per batch row into kv_scr at qi == 0.
    """
    qi = pl.program_id(1)
    D = x_ref.shape[-1]

    @pl.when(qi == 0)
    def _():
        xf = x_ref[...].astype(jnp.bfloat16)                               # (L, D)
        kv_scr[...] = (jnp.dot(xf, wqkv_ref[:, D:],
                               preferred_element_type=jnp.float32)
                       + bqkv_ref[...][:, D:])                             # (L, 2D)

    row0 = pl.multiple_of(qi * tq, tq)
    xt = x_ref[pl.ds(row0, tq), :]                                         # (tq, D)
    q = (jnp.dot(xt.astype(jnp.bfloat16), wqkv_ref[:, :D],
                 preferred_element_type=jnp.float32)
         + bqkv_ref[...][:, :D])                                           # (tq, D)
    kv = kv_scr[...]
    k = kv[:, :D]
    v = kv[:, D:]
    acc = xt + bo_ref[...]                       # residual + out-proj bias
    out = _mha_accumulate(q, k, v, wo_ref[...], scale, n_heads, acc, causal_row0=row0)
    o_ref[...] = _layer_norm(out, g_ref[...], b_ref[...]).astype(o_ref.dtype)


def _cross_ffn_kernel(x_ref, cr_ref, wq_ref, bq_ref, wkv_ref, bkv_ref, wo_ref, bo_ref,
                      g2_ref, bt2_ref, w1_ref, b1_ref, w2_ref, b2_ref, g3_ref, bt3_ref,
                      o_ref, kv_scr, *, n_heads, scale, tq):
    """Fused: cross-attention (Q proj + KV proj of cross + MHA + out-proj + residual
    + LayerNorm2) followed by the FFN (conv1/relu/conv2 + residual + LayerNorm3)."""
    qi = pl.program_id(1)
    D = x_ref.shape[-1]

    @pl.when(qi == 0)
    def _():
        cr = cr_ref[...].astype(jnp.bfloat16)                              # (S, D)
        kv_scr[...] = (jnp.dot(cr, wkv_ref[...],
                               preferred_element_type=jnp.float32)
                       + bkv_ref[...])                                     # (S, 2D)

    row0 = pl.multiple_of(qi * tq, tq)
    xt = x_ref[pl.ds(row0, tq), :]                                         # (tq, D)
    q = (jnp.dot(xt.astype(jnp.bfloat16), wq_ref[...],
                 preferred_element_type=jnp.float32) + bq_ref[...])        # (tq, D)
    kv = kv_scr[...]
    k = kv[:, :D]
    v = kv[:, D:]
    acc = xt + bo_ref[...]
    out = _mha_accumulate(q, k, v, wo_ref[...], scale, n_heads, acc)
    y1 = _layer_norm(out, g2_ref[...], bt2_ref[...])                       # x after norm2

    # FFN: conv1(k=1) -> relu -> conv2(k=1) + residual + LayerNorm3
    h = (jnp.dot(y1.astype(jnp.bfloat16), w1_ref[...],
                 preferred_element_type=jnp.float32) + b1_ref[...])
    h = jnp.maximum(h, 0.0).astype(jnp.bfloat16)
    y = (jnp.dot(h, w2_ref[...], preferred_element_type=jnp.float32) + b2_ref[...])
    o_ref[...] = _layer_norm(y1 + y, g3_ref[...], bt3_ref[...]).astype(o_ref.dtype)


def _final_kernel(x_ref, g_ref, b_ref, wp_ref, bp_ref, o_ref):
    """Fused: decoder-level LayerNorm + output projection (lane-dense padded output)."""
    x = x_ref[...]                                                         # (tm, D)
    xn = _layer_norm(x, g_ref[...], b_ref[...])
    o = (jnp.dot(xn.astype(jnp.bfloat16), wp_ref[...],
                 preferred_element_type=jnp.float32) + bp_ref[...])
    o_ref[...] = o.astype(o_ref.dtype)


# ---------------------------- tiling helpers ----------------------------

def _q_tile(L):
    """Query tile: full row if small, otherwise the largest divisor in {512,256,128}."""
    if L <= 512:
        return L
    for t in (512, 256, 128):
        if L % t == 0:
            return t
    return L


def _row_tile(M):
    if M <= 512:
        return M
    for t in (512, 256, 128):
        if M % t == 0:
            return t
    return 512   # ragged last block handled by Pallas (reads padded, writes clipped)


# ---------------------------- pallas_call wrappers ----------------------------

def self_attn_block(x, p, gamma, beta):
    B, L, D = x.shape
    scale = 1.0 / math.sqrt(D // N_HEADS)
    tq = _q_tile(L)
    nq = L // tq
    kern = functools.partial(_self_attn_kernel, n_heads=N_HEADS, scale=scale, tq=tq)
    return pl.pallas_call(
        kern,
        out_shape=jax.ShapeDtypeStruct((B, L, D), jnp.float32),
        grid=(B, nq),
        in_specs=[
            pl.BlockSpec((pl.Squeezed(), L, D), lambda b, q: (b, 0, 0)),   # full row, resident over q
            pl.BlockSpec((D, 3 * D), lambda b, q: (0, 0)),
            pl.BlockSpec((1, 3 * D), lambda b, q: (0, 0)),
            pl.BlockSpec((D, D), lambda b, q: (0, 0)),
            pl.BlockSpec((1, D), lambda b, q: (0, 0)),
            pl.BlockSpec((1, D), lambda b, q: (0, 0)),
            pl.BlockSpec((1, D), lambda b, q: (0, 0)),
        ],
        out_specs=pl.BlockSpec((pl.Squeezed(), tq, D), lambda b, q: (b, q, 0)),
        scratch_shapes=[pltpu.VMEM((L, 2 * D), jnp.float32)],
        compiler_params=pltpu.CompilerParams(
            dimension_semantics=("parallel", "arbitrary"),
            vmem_limit_bytes=VMEM_LIMIT),
    )(x, p["wqkv"], p["bqkv"].reshape(1, 3 * D), p["wo"], p["bo"].reshape(1, D),
      gamma.reshape(1, D), beta.reshape(1, D))


def cross_ffn_block(x, cross, lp):
    B, L, D = x.shape
    S = cross.shape[1]
    F = lp["w1"].shape[1]
    scale = 1.0 / math.sqrt(D // N_HEADS)
    tq = _q_tile(L)
    nq = L // tq
    ca = lp["cross_attn"]
    kern = functools.partial(_cross_ffn_kernel, n_heads=N_HEADS, scale=scale, tq=tq)
    return pl.pallas_call(
        kern,
        out_shape=jax.ShapeDtypeStruct((B, L, D), jnp.float32),
        grid=(B, nq),
        in_specs=[
            pl.BlockSpec((pl.Squeezed(), L, D), lambda b, q: (b, 0, 0)),
            pl.BlockSpec((pl.Squeezed(), S, D), lambda b, q: (b, 0, 0)),
            pl.BlockSpec((D, D), lambda b, q: (0, 0)),        # wq
            pl.BlockSpec((1, D), lambda b, q: (0, 0)),        # bq
            pl.BlockSpec((D, 2 * D), lambda b, q: (0, 0)),    # wkv
            pl.BlockSpec((1, 2 * D), lambda b, q: (0, 0)),    # bkv
            pl.BlockSpec((D, D), lambda b, q: (0, 0)),        # wo
            pl.BlockSpec((1, D), lambda b, q: (0, 0)),        # bo
            pl.BlockSpec((1, D), lambda b, q: (0, 0)),        # norm2 gamma
            pl.BlockSpec((1, D), lambda b, q: (0, 0)),        # norm2 beta
            pl.BlockSpec((D, F), lambda b, q: (0, 0)),        # w1
            pl.BlockSpec((1, F), lambda b, q: (0, 0)),        # b1
            pl.BlockSpec((F, D), lambda b, q: (0, 0)),        # w2
            pl.BlockSpec((1, D), lambda b, q: (0, 0)),        # b2
            pl.BlockSpec((1, D), lambda b, q: (0, 0)),        # norm3 gamma
            pl.BlockSpec((1, D), lambda b, q: (0, 0)),        # norm3 beta
        ],
        out_specs=pl.BlockSpec((pl.Squeezed(), tq, D), lambda b, q: (b, q, 0)),
        scratch_shapes=[pltpu.VMEM((S, 2 * D), jnp.float32)],
        compiler_params=pltpu.CompilerParams(
            dimension_semantics=("parallel", "arbitrary"),
            vmem_limit_bytes=VMEM_LIMIT),
    )(x, cross,
      ca["wq"], ca["bq"].reshape(1, D), ca["wkv"], ca["bkv"].reshape(1, 2 * D),
      ca["wo"], ca["bo"].reshape(1, D),
      lp["norm2_g"].reshape(1, D), lp["norm2_b"].reshape(1, D),
      lp["w1"], lp["b1"].reshape(1, F), lp["w2"], lp["b2"].reshape(1, D),
      lp["norm3_g"].reshape(1, D), lp["norm3_b"].reshape(1, D))


def final_norm_proj(x, gamma, beta, wp, bp):
    B, L, D = x.shape
    C = bp.shape[0]
    Cp = max(LANE, ((C + LANE - 1) // LANE) * LANE)     # lane-dense output width
    M = B * L
    tm = _row_tile(M)
    wp_pad = jnp.pad(wp, ((0, 0), (0, Cp - C)))         # bf16, zero-padded columns
    bp_pad = jnp.pad(bp, (0, Cp - C)).reshape(1, Cp)
    out = pl.pallas_call(
        _final_kernel,
        out_shape=jax.ShapeDtypeStruct((M, Cp), jnp.float32),
        grid=(pl.cdiv(M, tm),),
        in_specs=[
            pl.BlockSpec((tm, D), lambda i: (i, 0)),
            pl.BlockSpec((1, D), lambda i: (0, 0)),
            pl.BlockSpec((1, D), lambda i: (0, 0)),
            pl.BlockSpec((D, Cp), lambda i: (0, 0)),
            pl.BlockSpec((1, Cp), lambda i: (0, 0)),
        ],
        out_specs=pl.BlockSpec((tm, Cp), lambda i: (i, 0)),
        compiler_params=pltpu.CompilerParams(
            dimension_semantics=("parallel",),
            vmem_limit_bytes=VMEM_LIMIT),
    )(x.reshape(M, D), gamma.reshape(1, D), beta.reshape(1, D), wp_pad, bp_pad)
    return out[:, :C].reshape(B, L, C)


# ---------------------------- model glue ----------------------------

def decoder_layer(x, cross, lp):
    # dropout == identity (eval mode)
    x = self_attn_block(x, lp["self_attn"], lp["norm1_g"], lp["norm1_b"])
    return cross_ffn_block(x, cross, lp)


def decoder_forward(x, cross, params):
    for lp in params["layers"]:
        x = decoder_layer(x, cross, lp)
    return final_norm_proj(x, params["norm_g"], params["norm_b"],
                           params["proj_w"], params["proj_b"])


# ---------------------------- deterministic param init ----------------------------

def _init_linear(key, d_in, d_out, scale=0.1):
    kw, kb = jax.random.split(key)
    w = jax.random.normal(kw, (d_in, d_out), jnp.float32) * scale
    b = jax.random.normal(kb, (d_out,), jnp.float32) * scale
    return w, b


def _self_attn_params(key, d_model):
    k1, k2, k3, k4 = jax.random.split(key, 4)
    wq, bq = _init_linear(k1, d_model, d_model)
    wk, bk = _init_linear(k2, d_model, d_model)
    wv, bv = _init_linear(k3, d_model, d_model)
    wo, bo = _init_linear(k4, d_model, d_model)
    return {"wqkv": jnp.concatenate([wq, wk, wv], axis=1).astype(jnp.bfloat16),
            "bqkv": jnp.concatenate([bq, bk, bv], axis=0),
            "wo": wo.astype(jnp.bfloat16), "bo": bo}


def _cross_attn_params(key, d_model):
    k1, k2, k3, k4 = jax.random.split(key, 4)
    wq, bq = _init_linear(k1, d_model, d_model)
    wk, bk = _init_linear(k2, d_model, d_model)
    wv, bv = _init_linear(k3, d_model, d_model)
    wo, bo = _init_linear(k4, d_model, d_model)
    return {"wq": wq.astype(jnp.bfloat16), "bq": bq,
            "wkv": jnp.concatenate([wk, wv], axis=1).astype(jnp.bfloat16),
            "bkv": jnp.concatenate([bk, bv], axis=0),
            "wo": wo.astype(jnp.bfloat16), "bo": bo}


def init_params(key, num_layers, d_model, d_ff, c_out):
    layers = []
    for _ in range(num_layers):
        key, k_sa, k_ca, k_c1, k_c2 = jax.random.split(key, 5)
        w1, b1 = _init_linear(k_c1, d_model, d_ff)
        w2, b2 = _init_linear(k_c2, d_ff, d_model)
        layers.append({
            "self_attn": _self_attn_params(k_sa, d_model),
            "cross_attn": _cross_attn_params(k_ca, d_model),
            "w1": w1.astype(jnp.bfloat16), "b1": b1,
            "w2": w2.astype(jnp.bfloat16), "b2": b2,
            "norm1_g": jnp.ones((d_model,), jnp.float32),
            "norm1_b": jnp.zeros((d_model,), jnp.float32),
            "norm2_g": jnp.ones((d_model,), jnp.float32),
            "norm2_b": jnp.zeros((d_model,), jnp.float32),
            "norm3_g": jnp.ones((d_model,), jnp.float32),
            "norm3_b": jnp.zeros((d_model,), jnp.float32),
        })
    key, k_proj = jax.random.split(key)
    proj_w, proj_b = _init_linear(k_proj, d_model, c_out)
    return {
        "layers": layers,
        "norm_g": jnp.ones((d_model,), jnp.float32),
        "norm_b": jnp.zeros((d_model,), jnp.float32),
        "proj_w": proj_w.astype(jnp.bfloat16), "proj_b": proj_b,
    }


if __name__ == "__main__":
    B, L, S = 2, 8, 8
    D_MODEL, D_FF, C_OUT, NUM_LAYERS = 32, 64, 8, 2

    key = jax.random.PRNGKey(0)
    kx, kc, kp = jax.random.split(key, 3)
    x = jax.random.normal(kx, (B, L, D_MODEL), jnp.float32)
    cross = jax.random.normal(kc, (B, S, D_MODEL), jnp.float32)
    params = init_params(kp, NUM_LAYERS, D_MODEL, D_FF, C_OUT)

    out = decoder_forward(x, cross, params)
    out = jax.block_until_ready(out)
    assert out.shape == (B, L, C_OUT), out.shape
    assert bool(jnp.all(jnp.isfinite(out)))
    print("KERNEL_OK")
</pallas_src>

<mosaic_0001>
module attributes {stable_mosaic.version = 11 : i64} {
  func.func @_self_attn_kernel(%arg0: i32, %arg1: i32, %arg2: memref<1x8x32xf32, #tpu.memory_space<vmem>>, %arg3: memref<32x96xbf16, #tpu.memory_space<vmem>>, %arg4: memref<1x96xf32, #tpu.memory_space<vmem>>, %arg5: memref<32x32xbf16, #tpu.memory_space<vmem>>, %arg6: memref<1x32xf32, #tpu.memory_space<vmem>>, %arg7: memref<1x32xf32, #tpu.memory_space<vmem>>, %arg8: memref<1x32xf32, #tpu.memory_space<vmem>>, %arg9: memref<1x8x32xf32, #tpu.memory_space<vmem>>, %arg10: memref<8x64xf32, #tpu.memory_space<vmem>>) attributes {dimension_semantics = [#tpu.dimension_semantics<parallel>, #tpu.dimension_semantics<arbitrary>], iteration_bounds = array<i64: 2, 1>, scalar_prefetch = 0 : i64, scratch_operands = 1 : i64, tpu.core_type = #tpu.core_type<tc>, window_params = [{transform_indices = @transform_0, window_bounds = array<i64: 1, 8, 32>}, {pipeline_mode = #tpu.pipeline_mode<synchronous>, transform_indices = @transform_1, window_bounds = array<i64: 32, 96>}, {pipeline_mode = #tpu.pipeline_mode<synchronous>, transform_indices = @transform_2, window_bounds = array<i64: 1, 96>}, {pipeline_mode = #tpu.pipeline_mode<synchronous>, transform_indices = @transform_3, window_bounds = array<i64: 32, 32>}, {pipeline_mode = #tpu.pipeline_mode<synchronous>, transform_indices = @transform_4, window_bounds = array<i64: 1, 32>}, {pipeline_mode = #tpu.pipeline_mode<synchronous>, transform_indices = @transform_5, window_bounds = array<i64: 1, 32>}, {pipeline_mode = #tpu.pipeline_mode<synchronous>, transform_indices = @transform_6, window_bounds = array<i64: 1, 32>}, {transform_indices = @transform_7, window_bounds = array<i64: 1, 8, 32>}]} {
    %c0_i32 = arith.constant 0 : i32
    %0 = arith.cmpi eq, %arg1, %c0_i32 : i32
    %1 = arith.extui %0 : i1 to i32
    %c0_i32_0 = arith.constant 0 : i32
    %2 = arith.cmpi ne, %1, %c0_i32_0 : i32
    scf.if %2 {
      %c0_52 = arith.constant 0 : index
      %c0_53 = arith.constant 0 : index
      %c0_54 = arith.constant 0 : index
      %153 = vector.load %arg2[%c0_52, %c0_53, %c0_54] : memref<1x8x32xf32, #tpu.memory_space<vmem>>, vector<1x8x32xf32>
      %154 = vector.shape_cast %153 : vector<1x8x32xf32> to vector<8x32xf32>
      %155 = arith.truncf %154 : vector<8x32xf32> to vector<8x32xbf16>
      %c0_55 = arith.constant 0 : index
      %c32 = arith.constant 32 : index
      %156 = vector.load %arg3[%c0_55, %c32] : memref<32x96xbf16, #tpu.memory_space<vmem>>, vector<32x64xbf16>
      %cst_56 = arith.constant dense<0.000000e+00> : vector<8x64xf32>
      %157 = tpu.matmul %155, %156, %cst_56 {dimension_numbers = #tpu.dot_dimension_numbers<[1], [0], [0], [1], [0, 0, 1, 1], [], []>} : vector<8x32xbf16>, vector<32x64xbf16>, vector<8x64xf32> -> vector<8x64xf32>
      %c0_57 = arith.constant 0 : index
      %c0_58 = arith.constant 0 : index
      %158 = vector.load %arg4[%c0_57, %c0_58] : memref<1x96xf32, #tpu.memory_space<vmem>>, vector<1x96xf32>
      %159 = vector.extract_strided_slice %158 {offsets = [0, 32], sizes = [1, 64], strides = [1, 1]} : vector<1x96xf32> to vector<1x64xf32>
      %160 = vector.broadcast %159 : vector<1x64xf32> to vector<8x64xf32>
      %161 = arith.addf %157, %160 : vector<8x64xf32>
      %c0_59 = arith.constant 0 : index
      %c0_60 = arith.constant 0 : index
      %162 = vector.load %arg10[%c0_59, %c0_60] : memref<8x64xf32, #tpu.memory_space<vmem>>, vector<8x64xf32>
      tpu.vector_store %arg10[%c0_59, %c0_60], %161 {strides = array<i32>} : memref<8x64xf32, #tpu.memory_space<vmem>>, vector<8x64xf32>,
    } else {
    }
    %c8_i32 = arith.constant 8 : i32
    %3 = arith.muli %arg1, %c8_i32 : i32
    %4 = tpu.assume_multiple %3, 8 : i32
    %c0 = arith.constant 0 : index
    %5 = arith.index_cast %4 : i32 to index
    %c0_1 = arith.constant 0 : index
    %6 = vector.load %arg2[%c0, %5, %c0_1] : memref<1x8x32xf32, #tpu.memory_space<vmem>>, vector<1x8x32xf32>
    %7 = vector.shape_cast %6 : vector<1x8x32xf32> to vector<8x32xf32>
    %8 = arith.truncf %7 : vector<8x32xf32> to vector<8x32xbf16>
    %c0_2 = arith.constant 0 : index
    %c0_3 = arith.constant 0 : index
    %9 = vector.load %arg3[%c0_2, %c0_3] : memref<32x96xbf16, #tpu.memory_space<vmem>>, vector<32x32xbf16>
    %cst = arith.constant dense<0.000000e+00> : vector<8x32xf32>
    %10 = tpu.matmul %8, %9, %cst {dimension_numbers = #tpu.dot_dimension_numbers<[1], [0], [0], [1], [0, 0, 1, 1], [], []>} : vector<8x32xbf16>, vector<32x32xbf16>, vector<8x32xf32> -> vector<8x32xf32>
    %c0_4 = arith.constant 0 : index
    %c0_5 = arith.constant 0 : index
    %11 = vector.load %arg4[%c0_4, %c0_5] : memref<1x96xf32, #tpu.memory_space<vmem>>, vector<1x96xf32>
    %12 = vector.extract_strided_slice %11 {offsets = [0, 0], sizes = [1, 32], strides = [1, 1]} : vector<1x96xf32> to vector<1x32xf32>
    %13 = vector.broadcast %12 : vector<1x32xf32> to vector<8x32xf32>
    %14 = arith.addf %10, %13 : vector<8x32xf32>
    %c0_6 = arith.constant 0 : index
    %c0_7 = arith.constant 0 : index
    %15 = vector.load %arg10[%c0_6, %c0_7] : memref<8x64xf32, #tpu.memory_space<vmem>>, vector<8x64xf32>
    %16 = vector.extract_strided_slice %15 {offsets = [0, 0], sizes = [8, 32], strides = [1, 1]} : vector<8x64xf32> to vector<8x32xf32>
    %17 = vector.extract_strided_slice %15 {offsets = [0, 32], sizes = [8, 32], strides = [1, 1]} : vector<8x64xf32> to vector<8x32xf32>
    %c0_8 = arith.constant 0 : index
    %c0_9 = arith.constant 0 : index
    %18 = vector.load %arg6[%c0_8, %c0_9] : memref<1x32xf32, #tpu.memory_space<vmem>>, vector<1x32xf32>
    %19 = vector.broadcast %18 : vector<1x32xf32> to vector<8x32xf32>
    %20 = arith.addf %7, %19 : vector<8x32xf32>
    %c0_10 = arith.constant 0 : index
    %c0_11 = arith.constant 0 : index
    %21 = vector.load %arg5[%c0_10, %c0_11] : memref<32x32xbf16, #tpu.memory_space<vmem>>, vector<32x32xbf16>
    %22 = arith.truncf %14 : vector<8x32xf32> to vector<8x32xbf16>
    %23 = arith.truncf %16 : vector<8x32xf32> to vector<8x32xbf16>
    %24 = arith.truncf %17 : vector<8x32xf32> to vector<8x32xbf16>
    %25 = tpu.iota {dimensions = array<i32: 0>} : vector<8x8xi32>
    %26 = vector.broadcast %4 : i32 to vector<8x8xi32>
    %27 = arith.addi %26, %25 : vector<8x8xi32>
    %28 = tpu.iota {dimensions = array<i32: 1>} : vector<8x8xi32>
    %29 = arith.cmpi sgt, %28, %27 : vector<8x8xi32>
    %30 = vector.extract_strided_slice %22 {offsets = [0, 0], sizes = [8, 8], strides = [1, 1]} : vector<8x32xbf16> to vector<8x8xbf16>
    %31 = vector.extract_strided_slice %23 {offsets = [0, 0], sizes = [8, 8], strides = [1, 1]} : vector<8x32xbf16> to vector<8x8xbf16>
    %cst_12 = arith.constant dense<0.000000e+00> : vector<8x8xf32>
    %32 = tpu.matmul %30, %31, %cst_12 {dimension_numbers = #tpu.dot_dimension_numbers<[1], [1], [0], [0], [0, 0, 1, 0], [], []>} : vector<8x8xbf16>, vector<8x8xbf16>, vector<8x8xf32> -> vector<8x8xf32>
    %cst_13 = arith.constant 0.353553385 : f32
    %33 = vector.broadcast %cst_13 : f32 to vector<8x8xf32>
    %34 = arith.mulf %32, %33 : vector<8x8xf32>
    %cst_14 = arith.constant -1.000000e+30 : f32
    %35 = vector.broadcast %cst_14 : f32 to vector<8x8xf32>
    %36 = arith.select %29, %35, %34 : vector<8x8xi1>, vector<8x8xf32>
    %cst_15 = arith.constant dense<0xFF800000> : vector<8xf32>
    %37 = vector.multi_reduction <maximumf>, %36, %cst_15 [1] : vector<8x8xf32> to vector<8xf32>
    %38 = vector.shape_cast %37 : vector<8xf32> to vector<8x1xf32>
    %39 = vector.broadcast %38 : vector<8x1xf32> to vector<8x8xf32>
    %40 = arith.subf %36, %39 : vector<8x8xf32>
    %41 = math.exp %40 : vector<8x8xf32>
    %cst_16 = arith.constant dense<0.000000e+00> : vector<8xf32>
    %42 = vector.multi_reduction <add>, %41, %cst_16 [1] : vector<8x8xf32> to vector<8xf32>
    %43 = vector.shape_cast %42 : vector<8xf32> to vector<8x1xf32>
    %44 = tpu.reciprocal %43 {approx = true} : vector<8x1xf32> -> vector<8x1xf32>
    %45 = vector.broadcast %44 : vector<8x1xf32> to vector<8x8xf32>
    %46 = arith.mulf %41, %45 : vector<8x8xf32>
    %47 = arith.truncf %46 : vector<8x8xf32> to vector<8x8xbf16>
    %48 = vector.extract_strided_slice %24 {offsets = [0, 0], sizes = [8, 8], strides = [1, 1]} : vector<8x32xbf16> to vector<8x8xbf16>
    %cst_17 = arith.constant dense<0.000000e+00> : vector<8x8xf32>
    %49 = tpu.matmul %47, %48, %cst_17 {dimension_numbers = #tpu.dot_dimension_numbers<[1], [0], [0], [1], [0, 0, 1, 1], [], []>} : vector<8x8xbf16>, vector<8x8xbf16>, vector<8x8xf32> -> vector<8x8xf32>
    %50 = arith.truncf %49 : vector<8x8xf32> to vector<8x8xbf16>
    %51 = vector.extract_strided_slice %21 {offsets = [0, 0], sizes = [8, 32], strides = [1, 1]} : vector<32x32xbf16> to vector<8x32xbf16>
    %cst_18 = arith.constant dense<0.000000e+00> : vector<8x32xf32>
    %52 = tpu.matmul %50, %51, %cst_18 {dimension_numbers = #tpu.dot_dimension_numbers<[1], [0], [0], [1], [0, 0, 1, 1], [], []>} : vector<8x8xbf16>, vector<8x32xbf16>, vector<8x32xf32> -> vector<8x32xf32>
    %53 = arith.addf %20, %52 : vector<8x32xf32>
    %54 = vector.extract_strided_slice %22 {offsets = [0, 8], sizes = [8, 8], strides = [1, 1]} : vector<8x32xbf16> to vector<8x8xbf16>
    %55 = vector.extract_strided_slice %23 {offsets = [0, 8], sizes = [8, 8], strides = [1, 1]} : vector<8x32xbf16> to vector<8x8xbf16>
    %cst_19 = arith.constant dense<0.000000e+00> : vector<8x8xf32>
    %56 = tpu.matmul %54, %55, %cst_19 {dimension_numbers = #tpu.dot_dimension_numbers<[1], [1], [0], [0], [0, 0, 1, 0], [], []>} : vector<8x8xbf16>, vector<8x8xbf16>, vector<8x8xf32> -> vector<8x8xf32>
    %cst_20 = arith.constant 0.353553385 : f32
    %57 = vector.broadcast %cst_20 : f32 to vector<8x8xf32>
    %58 = arith.mulf %56, %57 : vector<8x8xf32>
    %cst_21 = arith.constant -1.000000e+30 : f32
    %59 = vector.broadcast %cst_21 : f32 to vector<8x8xf32>
    %60 = arith.select %29, %59, %58 : vector<8x8xi1>, vector<8x8xf32>
    %cst_22 = arith.constant dense<0xFF800000> : vector<8xf32>
    %61 = vector.multi_reduction <maximumf>, %60, %cst_22 [1] : vector<8x8xf32> to vector<8xf32>
    %62 = vector.shape_cast %61 : vector<8xf32> to vector<8x1xf32>
    %63 = vector.broadcast %62 : vector<8x1xf32> to vector<8x8xf32>
    %64 = arith.subf %60, %63 : vector<8x8xf32>
    %65 = math.exp %64 : vector<8x8xf32>
    %cst_23 = arith.constant dense<0.000000e+00> : vector<8xf32>
    %66 = vector.multi_reduction <add>, %65, %cst_23 [1] : vector<8x8xf32> to vector<8xf32>
    %67 = vector.shape_cast %66 : vector<8xf32> to vector<8x1xf32>
    %68 = tpu.reciprocal %67 {approx = true} : vector<8x1xf32> -> vector<8x1xf32>
    %69 = vector.broadcast %68 : vector<8x1xf32> to vector<8x8xf32>
    %70 = arith.mulf %65, %69 : vector<8x8xf32>
    %71 = arith.truncf %70 : vector<8x8xf32> to vector<8x8xbf16>
    %72 = vector.extract_strided_slice %24 {offsets = [0, 8], sizes = [8, 8], strides = [1, 1]} : vector<8x32xbf16> to vector<8x8xbf16>
    %cst_24 = arith.constant dense<0.000000e+00> : vector<8x8xf32>
    %73 = tpu.matmul %71, %72, %cst_24 {dimension_numbers = #tpu.dot_dimension_numbers<[1], [0], [0], [1], [0, 0, 1, 1], [], []>} : vector<8x8xbf16>, vector<8x8xbf16>, vector<8x8xf32> -> vector<8x8xf32>
    %74 = arith.truncf %73 : vector<8x8xf32> to vector<8x8xbf16>
    %75 = vector.extract_strided_slice %21 {offsets = [8, 0], sizes = [8, 32], strides = [1, 1]} : vector<32x32xbf16> to vector<8x32xbf16>
    %cst_25 = arith.constant dense<0.000000e+00> : vector<8x32xf32>
    %76 = tpu.matmul %74, %75, %cst_25 {dimension_numbers = #tpu.dot_dimension_numbers<[1], [0], [0], [1], [0, 0, 1, 1], [], []>} : vector<8x8xbf16>, vector<8x32xbf16>, vector<8x32xf32> -> vector<8x32xf32>
    %77 = arith.addf %53, %76 : vector<8x32xf32>
    %78 = vector.extract_strided_slice %22 {offsets = [0, 16], sizes = [8, 8], strides = [1, 1]} : vector<8x32xbf16> to vector<8x8xbf16>
    %79 = vector.extract_strided_slice %23 {offsets = [0, 16], sizes = [8, 8], strides = [1, 1]} : vector<8x32xbf16> to vector<8x8xbf16>
    %cst_26 = arith.constant dense<0.000000e+00> : vector<8x8xf32>
    %80 = tpu.matmul %78, %79, %cst_26 {dimension_numbers = #tpu.dot_dimension_numbers<[1], [1], [0], [0], [0, 0, 1, 0], [], []>} : vector<8x8xbf16>, vector<8x8xbf16>, vector<8x8xf32> -> vector<8x8xf32>
    %cst_27 = arith.constant 0.353553385 : f32
    %81 = vector.broadcast %cst_27 : f32 to vector<8x8xf32>
    %82 = arith.mulf %80, %81 : vector<8x8xf32>
    %cst_28 = arith.constant -1.000000e+30 : f32
    %83 = vector.broadcast %cst_28 : f32 to vector<8x8xf32>
    %84 = arith.select %29, %83, %82 : vector<8x8xi1>, vector<8x8xf32>
    %cst_29 = arith.constant dense<0xFF800000> : vector<8xf32>
    %85 = vector.multi_reduction <maximumf>, %84, %cst_29 [1] : vector<8x8xf32> to vector<8xf32>
    %86 = vector.shape_cast %85 : vector<8xf32> to vector<8x1xf32>
    %87 = vector.broadcast %86 : vector<8x1xf32> to vector<8x8xf32>
    %88 = arith.subf %84, %87 : vector<8x8xf32>
    %89 = math.exp %88 : vector<8x8xf32>
    %cst_30 = arith.constant dense<0.000000e+00> : vector<8xf32>
    %90 = vector.multi_reduction <add>, %89, %cst_30 [1] : vector<8x8xf32> to vector<8xf32>
    %91 = vector.shape_cast %90 : vector<8xf32> to vector<8x1xf32>
    %92 = tpu.reciprocal %91 {approx = true} : vector<8x1xf32> -> vector<8x1xf32>
    %93 = vector.broadcast %92 : vector<8x1xf32> to vector<8x8xf32>
    %94 = arith.mulf %89, %93 : vector<8x8xf32>
    %95 = arith.truncf %94 : vector<8x8xf32> to vector<8x8xbf16>
    %96 = vector.extract_strided_slice %24 {offsets = [0, 16], sizes = [8, 8], strides = [1, 1]} : vector<8x32xbf16> to vector<8x8xbf16>
    %cst_31 = arith.constant dense<0.000000e+00> : vector<8x8xf32>
    %97 = tpu.matmul %95, %96, %cst_31 {dimension_numbers = #tpu.dot_dimension_numbers<[1], [0], [0], [1], [0, 0, 1, 1], [], []>} : vector<8x8xbf16>, vector<8x8xbf16>, vector<8x8xf32> -> vector<8x8xf32>
    %98 = arith.truncf %97 : vector<8x8xf32> to vector<8x8xbf16>
    %99 = vector.extract_strided_slice %21 {offsets = [16, 0], sizes = [8, 32], strides = [1, 1]} : vector<32x32xbf16> to vector<8x32xbf16>
    %cst_32 = arith.constant dense<0.000000e+00> : vector<8x32xf32>
    %100 = tpu.matmul %98, %99, %cst_32 {dimension_numbers = #tpu.dot_dimension_numbers<[1], [0], [0], [1], [0, 0, 1, 1], [], []>} : vector<8x8xbf16>, vector<8x32xbf16>, vector<8x32xf32> -> vector<8x32xf32>
    %101 = arith.addf %77, %100 : vector<8x32xf32>
    %102 = vector.extract_strided_slice %22 {offsets = [0, 24], sizes = [8, 8], strides = [1, 1]} : vector<8x32xbf16> to vector<8x8xbf16>
    %103 = vector.extract_strided_slice %23 {offsets = [0, 24], sizes = [8, 8], strides = [1, 1]} : vector<8x32xbf16> to vector<8x8xbf16>
    %cst_33 = arith.constant dense<0.000000e+00> : vector<8x8xf32>
    %104 = tpu.matmul %102, %103, %cst_33 {dimension_numbers = #tpu.dot_dimension_numbers<[1], [1], [0], [0], [0, 0, 1, 0], [], []>} : vector<8x8xbf16>, vector<8x8xbf16>, vector<8x8xf32> -> vector<8x8xf32>
    %cst_34 = arith.constant 0.353553385 : f32
    %105 = vector.broadcast %cst_34 : f32 to vector<8x8xf32>
    %106 = arith.mulf %104, %105 : vector<8x8xf32>
    %cst_35 = arith.constant -1.000000e+30 : f32
    %107 = vector.broadcast %cst_35 : f32 to vector<8x8xf32>
    %108 = arith.select %29, %107, %106 : vector<8x8xi1>, vector<8x8xf32>
    %cst_36 = arith.constant dense<0xFF800000> : vector<8xf32>
    %109 = vector.multi_reduction <maximumf>, %108, %cst_36 [1] : vector<8x8xf32> to vector<8xf32>
    %110 = vector.shape_cast %109 : vector<8xf32> to vector<8x1xf32>
    %111 = vector.broadcast %110 : vector<8x1xf32> to vector<8x8xf32>
    %112 = arith.subf %108, %111 : vector<8x8xf32>
    %113 = math.exp %112 : vector<8x8xf32>
    %cst_37 = arith.constant dense<0.000000e+00> : vector<8xf32>
    %114 = vector.multi_reduction <add>, %113, %cst_37 [1] : vector<8x8xf32> to vector<8xf32>
    %115 = vector.shape_cast %114 : vector<8xf32> to vector<8x1xf32>
    %116 = tpu.reciprocal %115 {approx = true} : vector<8x1xf32> -> vector<8x1xf32>
    %117 = vector.broadcast %116 : vector<8x1xf32> to vector<8x8xf32>
    %118 = arith.mulf %113, %117 : vector<8x8xf32>
    %119 = arith.truncf %118 : vector<8x8xf32> to vector<8x8xbf16>
    %120 = vector.extract_strided_slice %24 {offsets = [0, 24], sizes = [8, 8], strides = [1, 1]} : vector<8x32xbf16> to vector<8x8xbf16>
    %cst_38 = arith.constant dense<0.000000e+00> : vector<8x8xf32>
    %121 = tpu.matmul %119, %120, %cst_38 {dimension_numbers = #tpu.dot_dimension_numbers<[1], [0], [0], [1], [0, 0, 1, 1], [], []>} : vector<8x8xbf16>, vector<8x8xbf16>, vector<8x8xf32> -> vector<8x8xf32>
    %122 = arith.truncf %121 : vector<8x8xf32> to vector<8x8xbf16>
    %123 = vector.extract_strided_slice %21 {offsets = [24, 0], sizes = [8, 32], strides = [1, 1]} : vector<32x32xbf16> to vector<8x32xbf16>
    %cst_39 = arith.constant dense<0.000000e+00> : vector<8x32xf32>
    %124 = tpu.matmul %122, %123, %cst_39 {dimension_numbers = #tpu.dot_dimension_numbers<[1], [0], [0], [1], [0, 0, 1, 1], [], []>} : vector<8x8xbf16>, vector<8x32xbf16>, vector<8x32xf32> -> vector<8x32xf32>
    %125 = arith.addf %101, %124 : vector<8x32xf32>
    %c0_40 = arith.constant 0 : index
    %c0_41 = arith.constant 0 : index
    %126 = vector.load %arg7[%c0_40, %c0_41] : memref<1x32xf32, #tpu.memory_space<vmem>>, vector<1x32xf32>
    %c0_42 = arith.constant 0 : index
    %c0_43 = arith.constant 0 : index
    %127 = vector.load %arg8[%c0_42, %c0_43] : memref<1x32xf32, #tpu.memory_space<vmem>>, vector<1x32xf32>
    %cst_44 = arith.constant dense<0.000000e+00> : vector<8xf32>
    %128 = vector.multi_reduction <add>, %125, %cst_44 [1] : vector<8x32xf32> to vector<8xf32>
    %129 = vector.shape_cast %128 : vector<8xf32> to vector<8x1xf32>
    %cst_45 = arith.constant 3.200000e+01 : f32
    %130 = vector.broadcast %cst_45 : f32 to vector<8x1xf32>
    %131 = arith.divf %129, %130 : vector<8x1xf32>
    %132 = vector.broadcast %131 : vector<8x1xf32> to vector<8x32xf32>
    %133 = arith.subf %125, %132 : vector<8x32xf32>
    %134 = arith.mulf %133, %133 : vector<8x32xf32>
    %cst_46 = arith.constant dense<0.000000e+00> : vector<8xf32>
    %135 = vector.multi_reduction <add>, %134, %cst_46 [1] : vector<8x32xf32> to vector<8xf32>
    %136 = vector.shape_cast %135 : vector<8xf32> to vector<8x1xf32>
    %cst_47 = arith.constant 3.200000e+01 : f32
    %137 = vector.broadcast %cst_47 : f32 to vector<8x1xf32>
    %138 = arith.divf %136, %137 : vector<8x1xf32>
    %139 = vector.broadcast %131 : vector<8x1xf32> to vector<8x32xf32>
    %140 = arith.subf %125, %139 : vector<8x32xf32>
    %cst_48 = arith.constant 9.99999974E-6 : f32
    %141 = vector.broadcast %cst_48 : f32 to vector<8x1xf32>
    %142 = arith.addf %138, %141 : vector<8x1xf32>
    %143 = math.rsqrt %142 : vector<8x1xf32>
    %144 = vector.broadcast %143 : vector<8x1xf32> to vector<8x32xf32>
    %145 = arith.mulf %140, %144 : vector<8x32xf32>
    %146 = vector.broadcast %126 : vector<1x32xf32> to vector<8x32xf32>
    %147 = arith.mulf %145, %146 : vector<8x32xf32>
    %148 = vector.broadcast %127 : vector<1x32xf32> to vector<8x32xf32>
    %149 = arith.addf %147, %148 : vector<8x32xf32>
    %c0_49 = arith.constant 0 : index
    %c0_50 = arith.constant 0 : index
    %c0_51 = arith.constant 0 : index
    %150 = vector.load %arg9[%c0_49, %c0_50, %c0_51] : memref<1x8x32xf32, #tpu.memory_space<vmem>>, vector<1x8x32xf32>
    %151 = vector.shape_cast %150 : vector<1x8x32xf32> to vector<8x32xf32>
    %152 = vector.shape_cast %149 : vector<8x32xf32> to vector<1x8x32xf32>
    tpu.vector_store %arg9[%c0_49, %c0_50, %c0_51], %152 {strides = array<i32>} : memref<1x8x32xf32, #tpu.memory_space<vmem>>, vector<1x8x32xf32>,
    return
  }
  func.func @transform_0(%arg0: i32, %arg1: i32) -> (i32, i32, i32) {
    %c0_i32 = arith.constant 0 : i32
    %c0_i32_0 = arith.constant 0 : i32
    %c0_i32_1 = arith.constant 0 : i32
    return %arg0, %c0_i32, %c0_i32_0 : i32, i32, i32
  }
  func.func @transform_1(%arg0: i32, %arg1: i32) -> (i32, i32) {
    %c0_i32 = arith.constant 0 : i32
    %c0_i32_0 = arith.constant 0 : i32
    %c0_i32_1 = arith.constant 0 : i32
    return %c0_i32, %c0_i32_0 : i32, i32
  }
  func.func @transform_2(%arg0: i32, %arg1: i32) -> (i32, i32) {
    %c0_i32 = arith.constant 0 : i32
    %c0_i32_0 = arith.constant 0 : i32
    %c0_i32_1 = arith.constant 0 : i32
    return %c0_i32, %c0_i32_0 : i32, i32
  }
  func.func @transform_3(%arg0: i32, %arg1: i32) -> (i32, i32) {
    %c0_i32 = arith.constant 0 : i32
    %c0_i32_0 = arith.constant 0 : i32
    %c0_i32_1 = arith.constant 0 : i32
    return %c0_i32, %c0_i32_0 : i32, i32
  }
  func.func @transform_4(%arg0: i32, %arg1: i32) -> (i32, i32) {
    %c0_i32 = arith.constant 0 : i32
    %c0_i32_0 = arith.constant 0 : i32
    %c0_i32_1 = arith.constant 0 : i32
    return %c0_i32, %c0_i32_0 : i32, i32
  }
  func.func @transform_5(%arg0: i32, %arg1: i32) -> (i32, i32) {
    %c0_i32 = arith.constant 0 : i32
    %c0_i32_0 = arith.constant 0 : i32
    %c0_i32_1 = arith.constant 0 : i32
    return %c0_i32, %c0_i32_0 : i32, i32
  }
  func.func @transform_6(%arg0: i32, %arg1: i32) -> (i32, i32) {
    %c0_i32 = arith.constant 0 : i32
    %c0_i32_0 = arith.constant 0 : i32
    %c0_i32_1 = arith.constant 0 : i32
    return %c0_i32, %c0_i32_0 : i32, i32
  }
  func.func @transform_7(%arg0: i32, %arg1: i32) -> (i32, i32, i32) {
    %c0_i32 = arith.constant 0 : i32
    %c0_i32_0 = arith.constant 0 : i32
    return %arg0, %arg1, %c0_i32 : i32, i32, i32
  }
}

</mosaic_0001>

<llo_original>
// kernel: tpu_custom_call.1
$region0: #{tpu_custom_call.1}
  #allocation0 [shape = 'u32[]', space=smem, size = 0x4, offset = 0x4, fixed_abs, tag = 'smem constant byte address 0x4 - core index']
  #allocation1 [shape = 'u32[144,128]{1,0:T(1,128)}', space=vmem, size = 0x12000, scoped, tag = 'internal scratch']
  #allocation2 [shape = 'f32[8,64]{1,0:T(8,128)}', space=vmem, size = 0x1000, scoped, tag = 'scratch operand']
  %s0 = inlined_call_operand.hbm [shape: f32[2,8,32], index: 0, kind: input, shape index: {}]
  %s1 = inlined_call_operand.hbm [shape: bf16[32,96], index: 1, kind: input, shape index: {}]
  %s2 = inlined_call_operand.vmem [shape: f32[1,96], index: 2, kind: input, shape index: {}]
  %s3 = inlined_call_operand.hbm [shape: bf16[32,32], index: 3, kind: input, shape index: {}]
  %s4 = inlined_call_operand.vmem [shape: f32[1,32], index: 4, kind: input, shape index: {}]
  %s5 = inlined_call_operand.vmem [shape: f32[1,32], index: 5, kind: input, shape index: {}]
  %s6 = inlined_call_operand.vmem [shape: f32[1,32], index: 6, kind: input, shape index: {}]
  %s7 = inlined_call_operand.hbm [shape: f32[2,8,32], index: 7, kind: output, shape index: {}]
  %s8 = sld [smem:[#allocation0]]
  $region77: #{tpu_custom_call.1} parent=0
    _
  %s10 = ssub.s32 1, %s8
  %s11 = scalar_select 0, %s10, %s8
  $region1: #{tpu_custom_call.1} parent=0
    #allocation3 [shape = 'u8[8192]{0}', space=vmem, size = 0x2000, scoped, tag = 'input window, operand 0']
    #allocation4 [shape = 's32[2]{0}', space=sflag, size = 0x8, scoped, tag = 'scoped memory for tpu_custom_call.1']
    #allocation5 [shape = 's32[2]{0}', space=sflag, size = 0x8, scoped, tag = 'scoped memory for tpu_custom_call.1']
    #allocation6 [shape = 'u8[8192]{0}', space=vmem, size = 0x2000, scoped, tag = 'input window, operand 1, single buffered']
    #allocation7 [shape = 's32[1]{0}', space=sflag, size = 0x4, scoped, tag = 'scoped memory for tpu_custom_call.1']
    #allocation8 [shape = 'u8[8192]{0}', space=vmem, size = 0x2000, scoped, tag = 'input window, operand 3, single buffered']
    #allocation9 [shape = 'u8[8192]{0}', space=vmem, size = 0x2000, scoped, tag = 'output window, operand 0']
    %12 = vsyncpa [#allocation4], 0
    %s13 = scalar_lea.sflag [#allocation4], 1
    %14 = vsyncpa %s13, 0
    %15 = vsyncpa [#allocation7], 0
    %16 = vsyncpa [#allocation5], 0
    %s17 = scalar_lea.sflag [#allocation5], 1
    %18 = vsyncpa %s17, 0
    loop: start=0, step=1, limit=4
    $region2: #{tpu_custom_call.1} parent=1 // loop_pre_header
      _
    $region3: #{tpu_custom_call.1} parent=1 // loop_header
      %s20 = sphi 0, %s24
      %p21 = scmp.ge.s32.totalorder %s20, 4
      %s27 = sphi 0, %s39
      %s28 = sphi 0, %s35
      %s29 = sphi 0, %s27
      %s30 = sphi 0, %s28
      %s31 = sphi 0, %s29
      %s32 = sphi 0, %s30
      %s42 = sphi 0, %s44
      %s45 = sphi 0, %s42
      %s46 = sphi 0, %s45
      %s62 = sphi 0, %s46
      %s66 = sphi 0, %s66
      %s68 = sphi 0, %s66
      %s69 = sphi 0, %s68
      %s83 = sphi 0, %s69
      %s87 = sphi 0, %s87
      %s89 = sphi 0, %s87
      %s90 = sphi 0, %s89
      %s104 = sphi 0, %s90
      %s108 = sphi 0, %s108
      %s110 = sphi 0, %s108
      %s111 = sphi 0, %s110
      %s125 = sphi 0, %s111
      %s129 = sphi 0, %s129
      %s131 = sphi 0, %s129
      %s132 = sphi 0, %s131
      %s146 = sphi 0, %s132
      %s150 = sphi 0, %s150
      %s152 = sphi 0, %s150
      %s153 = sphi 0, %s152
      %s167 = sphi 0, %s153
      %s171 = sphi 0, %s171
      %s173 = sphi 0, %s171
      %s174 = sphi 0, %s173
      %s188 = sphi 0, %s174
      %s196 = sphi 0, %s198
      %s199 = sphi 0, %s196
      %s200 = sphi 0, %s199
      %s216 = sphi 0, %s200
    $region4: #{tpu_custom_call.1} parent=1 // loop_header_branch
      %23 = sbr.rel (%p21) target = $region8
    $region5: #{tpu_custom_call.1} parent=1 // loop_body
      %s25 = ssub.s32 %s20, 1
      %s26 = ssub.s32 %s20, 2
      %s33 = sadd.s32 1, %s28
      %p34 = scmp.ge.s32.totalorder %s33, 1
      %s35 = scalar_select %p34, 0, %s33
      %s36 = sadd.s32 1, %s27
      %s37 = scalar_select %p34, %s36, %s27
      %p38 = scmp.ge.s32.totalorder %s37, 2
      %s39 = scalar_select %p38, 0, %s37
      %s40 = ssub.s32 %s27, %s39
      %p41 = scmp.eq.s32.totalorder %s40, 0
      %s43 = sadd.s32 %s42, 1
      %s44 = scalar_select %p41, %s42, %s43
      %p47 = pneg %p41
      %p48 = scmp.eq.s32.totalorder %s20, 1
      %p49 = por %p47, %p48
      %p50 = scmp.ne.s32.totalorder %s42, %s45
      %p51 = scmp.eq.s32.totalorder %s20, 0
      %p52 = por %p50, %p51
      %p53 = scmp.ne.s32.totalorder %s42, %s45
      %p54 = scmp.eq.s32.totalorder %s25, 1
      %p55 = por %p53, %p54
      %p56 = scmp.ne.s32.totalorder %s45, %s46
      %p57 = scmp.eq.s32.totalorder %s25, 0
      %p58 = por %p56, %p57
      %p59 = scmp.ne.s32.totalorder %s45, %s46
      %p60 = scmp.eq.s32.totalorder %s26, 1
      %p61 = por %p59, %p60
      %p63 = scmp.ne.s32.totalorder %s46, %s62
      %p64 = scmp.eq.s32.totalorder %s26, 0
      %p65 = por %p63, %p64
      %s67 = sadd.s32 %s66, 1
      %p70 = scmp.eq.s32.totalorder %s20, 1
      %p71 = scmp.ne.s32.totalorder %s66, %s68
      %p72 = scmp.eq.s32.totalorder %s20, 0
      %p73 = por %p71, %p72
      %p74 = scmp.ne.s32.totalorder %s66, %s68
      %p75 = scmp.eq.s32.totalorder %s25, 1
      %p76 = por %p74, %p75
      %p77 = scmp.ne.s32.totalorder %s68, %s69
      %p78 = scmp.eq.s32.totalorder %s25, 0
      %p79 = por %p77, %p78
      %p80 = scmp.ne.s32.totalorder %s68, %s69
      %p81 = scmp.eq.s32.totalorder %s26, 1
      %p82 = por %p80, %p81
      %p84 = scmp.ne.s32.totalorder %s69, %s83
      %p85 = scmp.eq.s32.totalorder %s26, 0
      %p86 = por %p84, %p85
      %s88 = sadd.s32 %s87, 1
      %p91 = scmp.eq.s32.totalorder %s20, 1
      %p92 = scmp.ne.s32.totalorder %s87, %s89
      %p93 = scmp.eq.s32.totalorder %s20, 0
      %p94 = por %p92, %p93
      %p95 = scmp.ne.s32.totalorder %s87, %s89
      %p96 = scmp.eq.s32.totalorder %s25, 1
      %p97 = por %p95, %p96
      %p98 = scmp.ne.s32.totalorder %s89, %s90
      %p99 = scmp.eq.s32.totalorder %s25, 0
      %p100 = por %p98, %p99
      %p101 = scmp.ne.s32.totalorder %s89, %s90
      %p102 = scmp.eq.s32.totalorder %s26, 1
      %p103 = por %p101, %p102
      %p105 = scmp.ne.s32.totalorder %s90, %s104
      %p106 = scmp.eq.s32.totalorder %s26, 0
      %p107 = por %p105, %p106
      %s109 = sadd.s32 %s108, 1
      %p112 = scmp.eq.s32.totalorder %s20, 1
      %p113 = scmp.ne.s32.totalorder %s108, %s110
      %p114 = scmp.eq.s32.totalorder %s20, 0
      %p115 = por %p113, %p114
      %p116 = scmp.ne.s32.totalorder %s108, %s110
      %p117 = scmp.eq.s32.totalorder %s25, 1
      %p118 = por %p116, %p117
      %p119 = scmp.ne.s32.totalorder %s110, %s111
      %p120 = scmp.eq.s32.totalorder %s25, 0
      %p121 = por %p119, %p120
      %p122 = scmp.ne.s32.totalorder %s110, %s111
      %p123 = scmp.eq.s32.totalorder %s26, 1
      %p124 = por %p122, %p123
      %p126 = scmp.ne.s32.totalorder %s111, %s125
      %p127 = scmp.eq.s32.totalorder %s26, 0
      %p128 = por %p126, %p127
      %s130 = sadd.s32 %s129, 1
      %p133 = scmp.eq.s32.totalorder %s20, 1
      %p134 = scmp.ne.s32.totalorder %s129, %s131
      %p135 = scmp.eq.s32.totalorder %s20, 0
      %p136 = por %p134, %p135
      %p137 = scmp.ne.s32.totalorder %s129, %s131
      %p138 = scmp.eq.s32.totalorder %s25, 1
      %p139 = por %p137, %p138
      %p140 = scmp.ne.s32.totalorder %s131, %s132
      %p141 = scmp.eq.s32.totalorder %s25, 0
      %p142 = por %p140, %p141
      %p143 = scmp.ne.s32.totalorder %s131, %s132
      %p144 = scmp.eq.s32.totalorder %s26, 1
      %p145 = por %p143, %p144
      %p147 = scmp.ne.s32.totalorder %s132, %s146
      %p148 = scmp.eq.s32.totalorder %s26, 0
      %p149 = por %p147, %p148
      %s151 = sadd.s32 %s150, 1
      %p154 = scmp.eq.s32.totalorder %s20, 1
      %p155 = scmp.ne.s32.totalorder %s150, %s152
      %p156 = scmp.eq.s32.totalorder %s20, 0
      %p157 = por %p155, %p156
      %p158 = scmp.ne.s32.totalorder %s150, %s152
      %p159 = scmp.eq.s32.totalorder %s25, 1
      %p160 = por %p158, %p159
      %p161 = scmp.ne.s32.totalorder %s152, %s153
      %p162 = scmp.eq.s32.totalorder %s25, 0
      %p163 = por %p161, %p162
      %p164 = scmp.ne.s32.totalorder %s152, %s153
      %p165 = scmp.eq.s32.totalorder %s26, 1
      %p166 = por %p164, %p165
      %p168 = scmp.ne.s32.totalorder %s153, %s167
      %p169 = scmp.eq.s32.totalorder %s26, 0
      %p170 = por %p168, %p169
      %s172 = sadd.s32 %s171, 1
      %p175 = scmp.eq.s32.totalorder %s20, 1
      %p176 = scmp.ne.s32.totalorder %s171, %s173
      %p177 = scmp.eq.s32.totalorder %s20, 0
      %p178 = por %p176, %p177
      %p179 = scmp.ne.s32.totalorder %s171, %s173
      %p180 = scmp.eq.s32.totalorder %s25, 1
      %p181 = por %p179, %p180
      %p182 = scmp.ne.s32.totalorder %s173, %s174
      %p183 = scmp.eq.s32.totalorder %s25, 0
      %p184 = por %p182, %p183
      %p185 = scmp.ne.s32.totalorder %s173, %s174
      %p186 = scmp.eq.s32.totalorder %s26, 1
      %p187 = por %p185, %p186
      %p189 = scmp.ne.s32.totalorder %s174, %s188
      %p190 = scmp.eq.s32.totalorder %s26, 0
      %p191 = por %p189, %p190
      %s192 = ssub.s32 %s27, %s39
      %s193 = ssub.s32 %s28, %s35
      %s194 = sor.u32 %s192, %s193
      %p195 = scmp.eq.s32.totalorder %s194, 0
      %s197 = sadd.s32 %s196, 1
      %s198 = scalar_select %p195, %s196, %s197
      %p201 = pneg %p195
      %p202 = scmp.eq.s32.totalorder %s20, 1
      %p203 = por %p201, %p202
      %p204 = scmp.ne.s32.totalorder %s196, %s199
      %p205 = scmp.eq.s32.totalorder %s20, 0
      %p206 = por %p204, %p205
      %p207 = scmp.ne.s32.totalorder %s196, %s199
      %p208 = scmp.eq.s32.totalorder %s25, 1
      %p209 = por %p207, %p208
      %p210 = scmp.ne.s32.totalorder %s199, %s200
      %p211 = scmp.eq.s32.totalorder %s25, 0
      %p212 = por %p210, %p211
      %p213 = scmp.ne.s32.totalorder %s199, %s200
      %p214 = scmp.eq.s32.totalorder %s26, 1
      %p215 = por %p213, %p214
      %p217 = scmp.ne.s32.totalorder %s200, %s216
      %p218 = scmp.eq.s32.totalorder %s26, 0
      %p219 = por %p217, %p218
      %p220 = scmp.le.s32.totalorder 1, %s20
      %p221 = scmp.lt.s32.totalorder %s20, 3
      %p222 = pnand %p220, %p221
      %p223 = pneg %p222
      // Predicated region
      $region9: #{tpu_custom_call.1} parent=5 // pred_check
        _
      $region10: #{tpu_custom_call.1} parent=5 // pred_check_branch
        %225 = sbr.rel (%p222) target = $region12
      $region11: #{tpu_custom_call.1} parent=5 // pred_region
        %s226 = ssub.s32 %s20, 1
        // Predicated region
        $region13: #{tpu_custom_call.1} parent=11 // pred_check
          %p227 = pneg %p79
        $region14: #{tpu_custom_call.1} parent=11 // pred_check_branch
          %229 = sbr.rel (%p227) target = $region16
        $region15: #{tpu_custom_call.1} parent=11 // pred_region
          %s231 = ssub.s32 256, 256
          %232 = vsyncadd [#allocation7], %s231
          %s233 = sshll.u32 [#allocation6], 4
          %s234 = int_to_ptr.vmem [resolvable:$true] %s233
          %239 = dma.hbm_to_vmem [thread:$0]  %s1, 256, %s234, [#allocation7], 64, 64, 4
        $region16: #{tpu_custom_call.1} parent=11 // pred_fallthru
          _
        // Predicated region
        $region17: #{tpu_custom_call.1} parent=11 // pred_check
          %p240 = pneg %p100
        $region18: #{tpu_custom_call.1} parent=11 // pred_check_branch
          %242 = sbr.rel (%p240) target = $region20
        $region19: #{tpu_custom_call.1} parent=11 // pred_region
          _
        $region20: #{tpu_custom_call.1} parent=11 // pred_fallthru
          _
        // Predicated region
        $region21: #{tpu_custom_call.1} parent=11 // pred_check
          %p243 = pneg %p121
        $region22: #{tpu_custom_call.1} parent=11 // pred_check_branch
          %245 = sbr.rel (%p243) target = $region24
        $region23: #{tpu_custom_call.1} parent=11 // pred_region
          %s247 = ssub.s32 256, 256
          %248 = vsyncadd [#allocation7], %s247
          %s249 = sshll.u32 [#allocation8], 4
          %s250 = int_to_ptr.vmem [resolvable:$true] %s249
          %255 = dma.hbm_to_vmem [thread:$0]  %s3, 256, %s250, [#allocation7], 64, 64, 4
        $region24: #{tpu_custom_call.1} parent=11 // pred_fallthru
          _
        // Predicated region
        $region25: #{tpu_custom_call.1} parent=11 // pred_check
          %p256 = pneg %p142
        $region26: #{tpu_custom_call.1} parent=11 // pred_check_branch
          %258 = sbr.rel (%p256) target = $region28
        $region27: #{tpu_custom_call.1} parent=11 // pred_region
          _
        $region28: #{tpu_custom_call.1} parent=11 // pred_fallthru
          _
        // Predicated region
        $region29: #{tpu_custom_call.1} parent=11 // pred_check
          %p259 = pneg %p163
        $region30: #{tpu_custom_call.1} parent=11 // pred_check_branch
          %261 = sbr.rel (%p259) target = $region32
        $region31: #{tpu_custom_call.1} parent=11 // pred_region
          _
        $region32: #{tpu_custom_call.1} parent=11 // pred_fallthru
          _
        // Predicated region
        $region33: #{tpu_custom_call.1} parent=11 // pred_check
          %p262 = pneg %p184
        $region34: #{tpu_custom_call.1} parent=11 // pred_check_branch
          %264 = sbr.rel (%p262) target = $region36
        $region35: #{tpu_custom_call.1} parent=11 // pred_region
          _
        $region36: #{tpu_custom_call.1} parent=11 // pred_fallthru
          _
      $region12: #{tpu_custom_call.1} parent=5 // pred_fallthru
        _
      %p265 = scmp.lt.s32.totalorder %s20, 2
      // Predicated region
      $region37: #{tpu_custom_call.1} parent=5 // pred_check
        %p266 = pneg %p265
      $region38: #{tpu_custom_call.1} parent=5 // pred_check_branch
        %268 = sbr.rel (%p266) target = $region40
      $region39: #{tpu_custom_call.1} parent=5 // pred_region
        // Predicated region
        $region41: #{tpu_custom_call.1} parent=39 // pred_check
          %p269 = pneg %p52
        $region42: #{tpu_custom_call.1} parent=39 // pred_check_branch
          %271 = sbr.rel (%p269) target = $region44
        $region43: #{tpu_custom_call.1} parent=39 // pred_region
          %s272 = sand.u32 %s42, 1
          %s273 = scalar_lea.sflag [#allocation4], %s272
          %s274 = sand.u32 %s42, 1
          %s275 = smul.addr %s274, 8
          %s276 = scalar_lea.vmem [#allocation3], %s275
          %s278 = ssub.s32 128, 128
          %279 = vsyncadd %s273, %s278
          %s280 = smul.addr %s27, 128
          %s281 = scalar_lea.hbm %s0, %s280
          %s283 = sshll.u32 %s276, 4
          %s284 = int_to_ptr.vmem [resolvable:$true] %s283
          %286 = dma.hbm_to_vmem [thread:$0]  %s281, 128, %s284, %s273
        $region44: #{tpu_custom_call.1} parent=39 // pred_fallthru
          _
      $region40: #{tpu_custom_call.1} parent=5 // pred_fallthru
        _
      %p287 = scmp.le.s32.totalorder 1, %s20
      %p288 = scmp.lt.s32.totalorder %s20, 3
      %p289 = pnand %p287, %p288
      %p290 = pneg %p289
      // Predicated region
      $region45: #{tpu_custom_call.1} parent=5 // pred_check
        _
      $region46: #{tpu_custom_call.1} parent=5 // pred_check_branch
        %292 = sbr.rel (%p289) target = $region48
      $region47: #{tpu_custom_call.1} parent=5 // pred_region
        %s293 = ssub.s32 %s20, 1
        %s294 = sand.u32 %s45, 1
        %s295 = scalar_lea.sflag [#allocation4], %s294
        %s296 = sand.u32 %s45, 1
        %s297 = smul.addr %s296, 8
        %s298 = scalar_lea.vmem [#allocation3], %s297
        // Predicated region
        $region49: #{tpu_custom_call.1} parent=47 // pred_check
          %p299 = pneg %p58
        $region50: #{tpu_custom_call.1} parent=47 // pred_check_branch
          %301 = sbr.rel (%p299) target = $region52
        $region51: #{tpu_custom_call.1} parent=47 // pred_region
          %302 = dma.done %s295, 128
        $region52: #{tpu_custom_call.1} parent=47 // pred_fallthru
          _
        // Predicated region
        $region53: #{tpu_custom_call.1} parent=47 // pred_check
          %p303 = pneg %p79
        $region54: #{tpu_custom_call.1} parent=47 // pred_check_branch
          %305 = sbr.rel (%p303) target = $region56
        $region55: #{tpu_custom_call.1} parent=47 // pred_region
          %306 = dma.done [#allocation7], 256
        $region56: #{tpu_custom_call.1} parent=47 // pred_fallthru
          _
        // Predicated region
        $region57: #{tpu_custom_call.1} parent=47 // pred_check
          %p307 = pneg %p121
        $region58: #{tpu_custom_call.1} parent=47 // pred_check_branch
          %309 = sbr.rel (%p307) target = $region60
        $region59: #{tpu_custom_call.1} parent=47 // pred_region
          %310 = dma.done [#allocation7], 256
        $region60: #{tpu_custom_call.1} parent=47 // pred_fallthru
          _
        %s311 = sand.u32 %s45, 1
        %s312 = scalar_lea.sflag [#allocation4], %s311
        %s313 = sand.u32 %s45, 1
        %s314 = smul.addr %s313, 8
        %s315 = scalar_lea.vmem [#allocation3], %s314
        %p316 = pneg %p58
        %p317 = pneg %p55
        %p318 = pneg %p79
        %p319 = pneg %p76
        %p320 = pneg %p100
        %p321 = pneg %p97
        %p322 = pneg %p121
        %p323 = pneg %p118
        %p324 = pneg %p142
        %p325 = pneg %p139
        %p326 = pneg %p163
        %p327 = pneg %p160
        %p328 = pneg %p184
        %p329 = pneg %p181
        %p330 = pneg %p212
        %p331 = pneg %p209
        %s332 = sand.u32 %s199, 1
        %s333 = scalar_lea.sflag [#allocation5], %s332
        %s334 = sand.u32 %s199, 1
        %s335 = smul.addr %s334, 8
        %s336 = scalar_lea.vmem [#allocation9], %s335
        %p338 = scmp.eq.s32.totalorder %s30, 0
        // Predicated region
        $region61: #{tpu_custom_call.1} parent=47 // pred_check
          %p339 = pneg %p338
        $region62: #{tpu_custom_call.1} parent=47 // pred_check_branch
          %341 = sbr.rel (%p339) target = $region64
        $region63: #{tpu_custom_call.1} parent=47 // pred_region
          %v342 = vld [vmem:[%s298] sm:$0xff]
          %v343 = vpack.c.bf16 %v342, %v342
          %v344 = vld [vmem:[#allocation6] sm:$0xf]
          %v345 = vld [vmem:[#allocation6 + $0x4] sm:$0xf]
          %v346 = vld [vmem:[#allocation6 + $0x8] sm:$0xf]
          %v347 = vld [vmem:[#allocation6 + $0xc] sm:$0xf]
          %v348 = vld [vmem:[%s2] sm:$0x1]
          %v350 = vlaneseq
          %v351 = vshrl.u32 %v350, 7
          %v352 = vsub.s32 0, %v351
          %v353 = vrot.slane %v348, %v352
          %v358 = vunpack.c.l.b16 %v344
          %v359 = vunpack.c.l.b16 %v345
          %v360 = vunpack.c.l.b16 %v346
          %v361 = vunpack.c.l.b16 %v347
          %v362 = vpack.c.b16 %v359, %v358
          %v363 = vpack.c.b16 %v361, %v360
          %364 = vrot.lane.b32.xlu0 %v362, 96
          %v365 = vpop.permute.xlu0 %364
          %366 = vrot.lane.b32.xlu0 %v363, 96
          %v367 = vpop.permute.xlu0 %366
          %370 = vrot.lane.b32.xlu0 %v353, 96
          %v371 = vpop.permute.xlu0 %370
          %vm373 = vcmask 261120
          %v375 = vsel %vm373, %v343, 0
          %377 = vmatprep.subr.bf16.mxu0 0
          %378 = vmatpush1.bf16.msra.mxu0 0
          %379 = vmatprep.subr.bf16.mxu0 0
          %380 = vmatpush1.bf16.msra.mxu0 0
          %381 = vmatprep.subr.bf16.mxu0 0
          %382 = vmatpush1.bf16.msra.mxu0 0
          %383 = vmatprep.subr.bf16.mxu0 0
          %384 = vmatpush1.bf16.msra.mxu0 0
          %385 = vmatprep.subr.bf16.mxu0 0
          %386 = vmatpush1.bf16.msra.mxu0 0
          %387 = vmatprep.subr.bf16.mxu0 0
          %388 = vmatpush1.bf16.msra.mxu0 0
          %389 = vmatprep.subr.bf16.mxu0 0
          %390 = vmatpush1.bf16.msra.mxu0 %v367
          %391 = vmatprep.subr.bf16.mxu0 0
          %392 = vmatpush1.bf16.msra.mxu0 %v365
          %393 = vmatprep.subr.bf16.mxu0 0
          %394 = vmatpush2.bf16.msra.mxu0 0
          %395 = vmatprep.subr.bf16.mxu0 0
          %396 = vmatpush2.bf16.msra.mxu0 0
          %397 = vmatprep.subr.bf16.mxu0 0
          %398 = vmatpush2.bf16.msra.mxu0 0
          %399 = vmatprep.subr.bf16.mxu0 0
          %400 = vmatpush2.bf16.msra.mxu0 0
          %401 = vmatprep.subr.bf16.mxu0 0
          %402 = vmatpush2.bf16.msra.mxu0 0
          %403 = vmatprep.subr.bf16.mxu0 0
          %404 = vmatpush2.bf16.msra.mxu0 0
          %405 = vmatprep.subr.bf16.mxu0 0
          %406 = vmatpush2.bf16.msra.mxu0 0
          %407 = vmatprep.subr.bf16.mxu0 0
          %408 = vmatpush2.bf16.msra.mxu0 0
          %409 = vmatprep.mubr.bf16.mxu0 0
          %410 = vmatmul.mubr.bf16.gmra.mxu0 %v375
          %v411 = vpop.f32.mrf.mxu0
          %v412 = vadd.f32 %v371, %v411
          %v413 = vpop.f32.mrf.mxu0
          %v414 = vpop.f32.mrf.mxu0
          %v415 = vpop.f32.mrf.mxu0
          %416 = vdwg.mxu0
          %vm417 = vcmask 523264
          %418 = vst.msk [vmem:[#allocation2] sm:$0xff] %vm417, %v412
        $region64: #{tpu_custom_call.1} parent=47 // pred_fallthru
          _
        %s419 = smul.u32 %s30, 8
        %s420 = scalar_lea.vmem %s298, %s419 [#allocation3]
        %v421 = vld [vmem:[%s420] sm:$0xff]
        %v422 = vpack.c.bf16 %v421, %v421
        %v423 = vld [vmem:[#allocation6] sm:$0xf]
        %v424 = vld [vmem:[#allocation6 + $0x4] sm:$0xf]
        %v425 = vld [vmem:[#allocation6 + $0x8] sm:$0xf]
        %v426 = vld [vmem:[#allocation6 + $0xc] sm:$0xf]
        %v427 = vld [vmem:[%s2] sm:$0x1]
        %v429 = vlaneseq
        %v430 = vshrl.u32 %v429, 7
        %v431 = vsub.s32 0, %v430
        %v432 = vrot.slane %v427, %v431
        %v438 = vunpack.c.l.b16 %v423
        %v439 = vunpack.c.l.b16 %v424
        %v440 = vunpack.c.l.b16 %v425
        %v441 = vunpack.c.l.b16 %v426
        %v442 = vpack.c.b16 %v439, %v438
        %v443 = vpack.c.b16 %v441, %v440
        %vm446 = vcmask 261120
        %v448 = vsel %vm446, %v422, 0
        %450 = vmatprep.subr.bf16.mxu0 0
        %451 = vmatpush1.bf16.msra.mxu0 0
        %452 = vmatprep.subr.bf16.mxu0 0
        %453 = vmatpush1.bf16.msra.mxu0 0
        %454 = vmatprep.subr.bf16.mxu0 0
        %455 = vmatpush1.bf16.msra.mxu0 0
        %456 = vmatprep.subr.bf16.mxu0 0
        %457 = vmatpush1.bf16.msra.mxu0 0
        %458 = vmatprep.subr.bf16.mxu0 0
        %459 = vmatpush1.bf16.msra.mxu0 0
        %460 = vmatprep.subr.bf16.mxu0 0
        %461 = vmatpush1.bf16.msra.mxu0 0
        %462 = vmatprep.subr.bf16.mxu0 0
        %463 = vmatpush1.bf16.msra.mxu0 %v443
        %464 = vmatprep.subr.bf16.mxu0 0
        %465 = vmatpush1.bf16.msra.mxu0 %v442
        %466 = vmatprep.subr.bf16.mxu0 0
        %467 = vmatpush2.bf16.msra.mxu0 0
        %468 = vmatprep.subr.bf16.mxu0 0
        %469 = vmatpush2.bf16.msra.mxu0 0
        %470 = vmatprep.subr.bf16.mxu0 0
        %471 = vmatpush2.bf16.msra.mxu0 0
        %472 = vmatprep.subr.bf16.mxu0 0
        %473 = vmatpush2.bf16.msra.mxu0 0
        %474 = vmatprep.subr.bf16.mxu0 0
        %475 = vmatpush2.bf16.msra.mxu0 0
        %476 = vmatprep.subr.bf16.mxu0 0
        %477 = vmatpush2.bf16.msra.mxu0 0
        %478 = vmatprep.subr.bf16.mxu0 0
        %479 = vmatpush2.bf16.msra.mxu0 0
        %480 = vmatprep.subr.bf16.mxu0 0
        %481 = vmatpush2.bf16.msra.mxu0 0
        %482 = vmatprep.mubr.bf16.mxu0 0
        %483 = vmatmul.mubr.bf16.gmra.mxu0 %v448
        %v484 = vpop.f32.mrf.mxu0
        %v485 = vadd.f32 %v432, %v484
        %v486 = vpop.f32.mrf.mxu0
        %v487 = vpop.f32.mrf.mxu0
        %v488 = vpop.f32.mrf.mxu0
        %489 = vdwg.mxu0
        %v490 = vld [vmem:[#allocation2] sm:$0xff]
        %v491 = vld [vmem:[%s4] sm:$0x1]
        %v493 = vlaneseq
        %v494 = vshrl.u32 %v493, 7
        %v495 = vsub.s32 0, %v494
        %v496 = vrot.slane %v491, %v495
        %v498 = vadd.f32 %v421, %v496
        %v499 = vld [vmem:[#allocation8] sm:$0xf]
        %v500 = vld [vmem:[#allocation8 + $0x4] sm:$0xf]
        %v501 = vld [vmem:[#allocation8 + $0x8] sm:$0xf]
        %v502 = vld [vmem:[#allocation8 + $0xc] sm:$0xf]
        %v503 = vpack.c.bf16 %v485, %v485
        %v504 = vpack.c.bf16 %v490, %v490
        %v505 = vlaneseq
        %v506 = vshrl.u32 %v505, 7
        %v507 = vstv %s419
        %v508 = vadd.s32 %v507, %v506
        %v509 = vlaneseq
        %v510 = vand.u32 %v509, 127
        %vm511 = vcmp.gt.s32.totalorder %v510, %v508
        %vm512 = vcmask 64512
        %v514 = vsel %vm512, %v503, 0
        %v517 = vsel %vm512, %v504, 0
        %519 = vmatprep.subr.bf16.mxu0 0
        %520 = vmatpush1.bf16.xpose.msra.mxu0 0
        %521 = vmatprep.subr.bf16.mxu0 0
        %522 = vmatpush1.bf16.xpose.msra.mxu0 0
        %523 = vmatprep.subr.bf16.mxu0 0
        %524 = vmatpush1.bf16.xpose.msra.mxu0 0
        %525 = vmatprep.subr.bf16.mxu0 0
        %526 = vmatpush1.bf16.xpose.msra.mxu0 0
        %527 = vmatprep.subr.bf16.mxu0 0
        %528 = vmatpush1.bf16.xpose.msra.mxu0 0
        %529 = vmatprep.subr.bf16.mxu0 0
        %530 = vmatpush1.bf16.xpose.msra.mxu0 0
        %531 = vmatprep.subr.bf16.mxu0 0
        %532 = vmatpush1.bf16.xpose.msra.mxu0 0
        %533 = vmatprep.subr.bf16.mxu0 0
        %534 = vmatpush1.bf16.xpose.msra.mxu0 %v517
        %535 = vmatprep.subr.bf16.mxu0 0
        %536 = vmatpush2.bf16.xpose.msra.mxu0 0
        %537 = vmatprep.subr.bf16.mxu0 0
        %538 = vmatpush2.bf16.xpose.msra.mxu0 0
        %539 = vmatprep.subr.bf16.mxu0 0
        %540 = vmatpush2.bf16.xpose.msra.mxu0 0
        %541 = vmatprep.subr.bf16.mxu0 0
        %542 = vmatpush2.bf16.xpose.msra.mxu0 0
        %543 = vmatprep.subr.bf16.mxu0 0
        %544 = vmatpush2.bf16.xpose.msra.mxu0 0
        %545 = vmatprep.subr.bf16.mxu0 0
        %546 = vmatpush2.bf16.xpose.msra.mxu0 0
        %547 = vmatprep.subr.bf16.mxu0 0
        %548 = vmatpush2.bf16.xpose.msra.mxu0 0
        %549 = vmatprep.subr.bf16.mxu0 0
        %550 = vmatpush2.bf16.xpose.msra.mxu0 0
        %551 = vmatprep.mubr.bf16.mxu0 0
        %552 = vmatmul.mubr.bf16.gmra.mxu0 %v514
        %v553 = vpop.f32.mrf.mxu0
        %v554 = vadd.f32 0.0, %v553
        %v555 = vpop.f32.mrf.mxu0
        %v556 = vpop.f32.mrf.mxu0
        %v557 = vpop.f32.mrf.mxu0
        %558 = vdwg.mxu0
        %v559 = vmul.f32 %v554, 0.35355338
        %v560 = vsel %vm511, -1e+30, %v559
        %v561 = vsel %vm512, %v560, -inf
        %562 = vmax.xlane.f32.xlu0 %v561
        %v563 = vpop.xlane.xlu0 %562
        %v564 = vsub.f32 %v560, %v563
        %v565 = vmul.f32 %v564, 1.442695
        %v566 = vpow.pop %v565
        %v567 = vsel %vm512, %v566, 0.0
        %568 = vadd.xlane.f32.xlu0 %v567
        %v569 = vpop.xlane.xlu0 %568
        %v570 = vrcp.pop %v569
        %v571 = vmul.f32 %v566, %v570
        %v572 = vpack.c.bf16 %v571, %v571
        %574 = vrot.lane.b32.xlu0 %v504, 96
        %v575 = vpop.permute.xlu0 %574
        %v577 = vsel %vm512, %v572, 0
        %vm579 = vcmask 1043456
        %v581 = vsel %vm579, %v575, 0
        %583 = vmatprep.subr.bf16.mxu0 0
        %584 = vmatpush1.bf16.msra.mxu0 0
        %585 = vmatprep.subr.bf16.mxu0 0
        %586 = vmatpush1.bf16.msra.mxu0 0
        %587 = vmatprep.subr.bf16.mxu0 0
        %588 = vmatpush1.bf16.msra.mxu0 0
        %589 = vmatprep.subr.bf16.mxu0 0
        %590 = vmatpush1.bf16.msra.mxu0 0
        %591 = vmatprep.subr.bf16.mxu0 0
        %592 = vmatpush1.bf16.msra.mxu0 0
        %593 = vmatprep.subr.bf16.mxu0 0
        %594 = vmatpush1.bf16.msra.mxu0 0
        %595 = vmatprep.subr.bf16.mxu0 0
        %596 = vmatpush1.bf16.msra.mxu0 0
        %597 = vmatprep.subr.bf16.mxu0 0
        %598 = vmatpush1.bf16.msra.mxu0 %v581
        %599 = vmatprep.subr.bf16.mxu0 0
        %600 = vmatpush2.bf16.msra.mxu0 0
        %601 = vmatprep.subr.bf16.mxu0 0
        %602 = vmatpush2.bf16.msra.mxu0 0
        %603 = vmatprep.subr.bf16.mxu0 0
        %604 = vmatpush2.bf16.msra.mxu0 0
        %605 = vmatprep.subr.bf16.mxu0 0
        %606 = vmatpush2.bf16.msra.mxu0 0
        %607 = vmatprep.subr.bf16.mxu0 0
        %608 = vmatpush2.bf16.msra.mxu0 0
        %609 = vmatprep.subr.bf16.mxu0 0
        %610 = vmatpush2.bf16.msra.mxu0 0
        %611 = vmatprep.subr.bf16.mxu0 0
        %612 = vmatpush2.bf16.msra.mxu0 0
        %613 = vmatprep.subr.bf16.mxu0 0
        %614 = vmatpush2.bf16.msra.mxu0 0
        %615 = vmatprep.mubr.bf16.mxu0 0
        %616 = vmatmul.mubr.bf16.gmra.mxu0 %v577
        %v617 = vpop.f32.mrf.mxu0
        %v618 = vadd.f32 0.0, %v617
        %v619 = vpop.f32.mrf.mxu0
        %v620 = vpop.f32.mrf.mxu0
        %v621 = vpop.f32.mrf.mxu0
        %622 = vdwg.mxu0
        %v623 = vpack.c.bf16 %v618, %v618
        %v625 = vsel %vm512, %v623, 0
        %v628 = vsel %vm579, %v499, 0
        %630 = vmatprep.subr.bf16.mxu0 0
        %631 = vmatpush1.bf16.msra.mxu0 0
        %632 = vmatprep.subr.bf16.mxu0 0
        %633 = vmatpush1.bf16.msra.mxu0 0
        %634 = vmatprep.subr.bf16.mxu0 0
        %635 = vmatpush1.bf16.msra.mxu0 0
        %636 = vmatprep.subr.bf16.mxu0 0
        %637 = vmatpush1.bf16.msra.mxu0 0
        %638 = vmatprep.subr.bf16.mxu0 0
        %639 = vmatpush1.bf16.msra.mxu0 0
        %640 = vmatprep.subr.bf16.mxu0 0
        %641 = vmatpush1.bf16.msra.mxu0 0
        %642 = vmatprep.subr.bf16.mxu0 0
        %643 = vmatpush1.bf16.msra.mxu0 0
        %644 = vmatprep.subr.bf16.mxu0 0
        %645 = vmatpush1.bf16.msra.mxu0 %v628
        %646 = vmatprep.subr.bf16.mxu0 0
        %647 = vmatpush2.bf16.msra.mxu0 0
        %648 = vmatprep.subr.bf16.mxu0 0
        %649 = vmatpush2.bf16.msra.mxu0 0
        %650 = vmatprep.subr.bf16.mxu0 0
        %651 = vmatpush2.bf16.msra.mxu0 0
        %652 = vmatprep.subr.bf16.mxu0 0
        %653 = vmatpush2.bf16.msra.mxu0 0
        %654 = vmatprep.subr.bf16.mxu0 0
        %655 = vmatpush2.bf16.msra.mxu0 0
        %656 = vmatprep.subr.bf16.mxu0 0
        %657 = vmatpush2.bf16.msra.mxu0 0
        %658 = vmatprep.subr.bf16.mxu0 0
        %659 = vmatpush2.bf16.msra.mxu0 0
        %660 = vmatprep.subr.bf16.mxu0 0
        %661 = vmatpush2.bf16.msra.mxu0 0
        %662 = vmatprep.mubr.bf16.mxu0 0
        %663 = vmatmul.mubr.bf16.gmra.mxu0 %v625
        %v664 = vpop.f32.mrf.mxu0
        %v665 = vadd.f32 0.0, %v664
        %v666 = vpop.f32.mrf.mxu0
        %v667 = vpop.f32.mrf.mxu0
        %v668 = vpop.f32.mrf.mxu0
        %669 = vdwg.mxu0
        %v670 = vadd.f32 %v498, %v665
        %672 = vrot.lane.b32.xlu0 %v503, 120
        %v673 = vpop.permute.xlu0 %672
        %674 = vrot.lane.b32.xlu0 %v504, 120
        %v675 = vpop.permute.xlu0 %674
        %v677 = vsel %vm512, %v673, 0
        %v680 = vsel %vm512, %v675, 0
        %682 = vmatprep.subr.bf16.mxu0 0
        %683 = vmatpush1.bf16.xpose.msra.mxu0 0
        %684 = vmatprep.subr.bf16.mxu0 0
        %685 = vmatpush1.bf16.xpose.msra.mxu0 0
        %686 = vmatprep.subr.bf16.mxu0 0
        %687 = vmatpush1.bf16.xpose.msra.mxu0 0
        %688 = vmatprep.subr.bf16.mxu0 0
        %689 = vmatpush1.bf16.xpose.msra.mxu0 0
        %690 = vmatprep.subr.bf16.mxu0 0
        %691 = vmatpush1.bf16.xpose.msra.mxu0 0
        %692 = vmatprep.subr.bf16.mxu0 0
        %693 = vmatpush1.bf16.xpose.msra.mxu0 0
        %694 = vmatprep.subr.bf16.mxu0 0
        %695 = vmatpush1.bf16.xpose.msra.mxu0 0
        %696 = vmatprep.subr.bf16.mxu0 0
        %697 = vmatpush1.bf16.xpose.msra.mxu0 %v680
        %698 = vmatprep.subr.bf16.mxu0 0
        %699 = vmatpush2.bf16.xpose.msra.mxu0 0
        %700 = vmatprep.subr.bf16.mxu0 0
        %701 = vmatpush2.bf16.xpose.msra.mxu0 0
        %702 = vmatprep.subr.bf16.mxu0 0
        %703 = vmatpush2.bf16.xpose.msra.mxu0 0
        %704 = vmatprep.subr.bf16.mxu0 0
        %705 = vmatpush2.bf16.xpose.msra.mxu0 0
        %706 = vmatprep.subr.bf16.mxu0 0
        %707 = vmatpush2.bf16.xpose.msra.mxu0 0
        %708 = vmatprep.subr.bf16.mxu0 0
        %709 = vmatpush2.bf16.xpose.msra.mxu0 0
        %710 = vmatprep.subr.bf16.mxu0 0
        %711 = vmatpush2.bf16.xpose.msra.mxu0 0
        %712 = vmatprep.subr.bf16.mxu0 0
        %713 = vmatpush2.bf16.xpose.msra.mxu0 0
        %714 = vmatprep.mubr.bf16.mxu0 0
        %715 = vmatmul.mubr.bf16.gmra.mxu0 %v677
        %v716 = vpop.f32.mrf.mxu0
        %v717 = vadd.f32 0.0, %v716
        %v718 = vpop.f32.mrf.mxu0
        %v719 = vpop.f32.mrf.mxu0
        %v720 = vpop.f32.mrf.mxu0
        %721 = vdwg.mxu0
        %v722 = vmul.f32 %v717, 0.35355338
        %v723 = vsel %vm511, -1e+30, %v722
        %v724 = vsel %vm512, %v723, -inf
        %725 = vmax.xlane.f32.xlu0 %v724
        %v726 = vpop.xlane.xlu0 %725
        %v727 = vsub.f32 %v723, %v726
        %v728 = vmul.f32 %v727, 1.442695
        %v729 = vpow.pop %v728
        %v730 = vsel %vm512, %v729, 0.0
        %731 = vadd.xlane.f32.xlu0 %v730
        %v732 = vpop.xlane.xlu0 %731
        %v733 = vrcp.pop %v732
        %v734 = vmul.f32 %v729, %v733
        %v735 = vpack.c.bf16 %v734, %v734
        %736 = vrot.lane.b32.xlu0 %v504, 88
        %v737 = vpop.permute.xlu0 %736
        %v739 = vsel %vm512, %v735, 0
        %v742 = vsel %vm579, %v737, 0
        %744 = vmatprep.subr.bf16.mxu0 0
        %745 = vmatpush1.bf16.msra.mxu0 0
        %746 = vmatprep.subr.bf16.mxu0 0
        %747 = vmatpush1.bf16.msra.mxu0 0
        %748 = vmatprep.subr.bf16.mxu0 0
        %749 = vmatpush1.bf16.msra.mxu0 0
        %750 = vmatprep.subr.bf16.mxu0 0
        %751 = vmatpush1.bf16.msra.mxu0 0
        %752 = vmatprep.subr.bf16.mxu0 0
        %753 = vmatpush1.bf16.msra.mxu0 0
        %754 = vmatprep.subr.bf16.mxu0 0
        %755 = vmatpush1.bf16.msra.mxu0 0
        %756 = vmatprep.subr.bf16.mxu0 0
        %757 = vmatpush1.bf16.msra.mxu0 0
        %758 = vmatprep.subr.bf16.mxu0 0
        %759 = vmatpush1.bf16.msra.mxu0 %v742
        %760 = vmatprep.subr.bf16.mxu0 0
        %761 = vmatpush2.bf16.msra.mxu0 0
        %762 = vmatprep.subr.bf16.mxu0 0
        %763 = vmatpush2.bf16.msra.mxu0 0
        %764 = vmatprep.subr.bf16.mxu0 0
        %765 = vmatpush2.bf16.msra.mxu0 0
        %766 = vmatprep.subr.bf16.mxu0 0
        %767 = vmatpush2.bf16.msra.mxu0 0
        %768 = vmatprep.subr.bf16.mxu0 0
        %769 = vmatpush2.bf16.msra.mxu0 0
        %770 = vmatprep.subr.bf16.mxu0 0
        %771 = vmatpush2.bf16.msra.mxu0 0
        %772 = vmatprep.subr.bf16.mxu0 0
        %773 = vmatpush2.bf16.msra.mxu0 0
        %774 = vmatprep.subr.bf16.mxu0 0
        %775 = vmatpush2.bf16.msra.mxu0 0
        %776 = vmatprep.mubr.bf16.mxu0 0
        %777 = vmatmul.mubr.bf16.gmra.mxu0 %v739
        %v778 = vpop.f32.mrf.mxu0
        %v779 = vadd.f32 0.0, %v778
        %v780 = vpop.f32.mrf.mxu0
        %v781 = vpop.f32.mrf.mxu0
        %v782 = vpop.f32.mrf.mxu0
        %783 = vdwg.mxu0
        %v784 = vpack.c.bf16 %v779, %v779
        %v786 = vsel %vm512, %v784, 0
        %v789 = vsel %vm579, %v500, 0
        %791 = vmatprep.subr.bf16.mxu0 0
        %792 = vmatpush1.bf16.msra.mxu0 0
        %793 = vmatprep.subr.bf16.mxu0 0
        %794 = vmatpush1.bf16.msra.mxu0 0
        %795 = vmatprep.subr.bf16.mxu0 0
        %796 = vmatpush1.bf16.msra.mxu0 0
        %797 = vmatprep.subr.bf16.mxu0 0
        %798 = vmatpush1.bf16.msra.mxu0 0
        %799 = vmatprep.subr.bf16.mxu0 0
        %800 = vmatpush1.bf16.msra.mxu0 0
        %801 = vmatprep.subr.bf16.mxu0 0
        %802 = vmatpush1.bf16.msra.mxu0 0
        %803 = vmatprep.subr.bf16.mxu0 0
        %804 = vmatpush1.bf16.msra.mxu0 0
        %805 = vmatprep.subr.bf16.mxu0 0
        %806 = vmatpush1.bf16.msra.mxu0 %v789
        %807 = vmatprep.subr.bf16.mxu0 0
        %808 = vmatpush2.bf16.msra.mxu0 0
        %809 = vmatprep.subr.bf16.mxu0 0
        %810 = vmatpush2.bf16.msra.mxu0 0
        %811 = vmatprep.subr.bf16.mxu0 0
        %812 = vmatpush2.bf16.msra.mxu0 0
        %813 = vmatprep.subr.bf16.mxu0 0
        %814 = vmatpush2.bf16.msra.mxu0 0
        %815 = vmatprep.subr.bf16.mxu0 0
        %816 = vmatpush2.bf16.msra.mxu0 0
        %817 = vmatprep.subr.bf16.mxu0 0
        %818 = vmatpush2.bf16.msra.mxu0 0
        %819 = vmatprep.subr.bf16.mxu0 0
        %820 = vmatpush2.bf16.msra.mxu0 0
        %821 = vmatprep.subr.bf16.mxu0 0
        %822 = vmatpush2.bf16.msra.mxu0 0
        %823 = vmatprep.mubr.bf16.mxu0 0
        %824 = vmatmul.mubr.bf16.gmra.mxu0 %v786
        %v825 = vpop.f32.mrf.mxu0
        %v826 = vadd.f32 0.0, %v825
        %v827 = vpop.f32.mrf.mxu0
        %v828 = vpop.f32.mrf.mxu0
        %v829 = vpop.f32.mrf.mxu0
        %830 = vdwg.mxu0
        %v831 = vadd.f32 %v670, %v826
        %832 = vrot.lane.b32.xlu0 %v503, 112
        %v833 = vpop.permute.xlu0 %832
        %834 = vrot.lane.b32.xlu0 %v504, 112
        %v835 = vpop.permute.xlu0 %834
        %v837 = vsel %vm512, %v833, 0
        %v840 = vsel %vm512, %v835, 0
        %842 = vmatprep.subr.bf16.mxu0 0
        %843 = vmatpush1.bf16.xpose.msra.mxu0 0
        %844 = vmatprep.subr.bf16.mxu0 0
        %845 = vmatpush1.bf16.xpose.msra.mxu0 0
        %846 = vmatprep.subr.bf16.mxu0 0
        %847 = vmatpush1.bf16.xpose.msra.mxu0 0
        %848 = vmatprep.subr.bf16.mxu0 0
        %849 = vmatpush1.bf16.xpose.msra.mxu0 0
        %850 = vmatprep.subr.bf16.mxu0 0
        %851 = vmatpush1.bf16.xpose.msra.mxu0 0
        %852 = vmatprep.subr.bf16.mxu0 0
        %853 = vmatpush1.bf16.xpose.msra.mxu0 0
        %854 = vmatprep.subr.bf16.mxu0 0
        %855 = vmatpush1.bf16.xpose.msra.mxu0 0
        %856 = vmatprep.subr.bf16.mxu0 0
        %857 = vmatpush1.bf16.xpose.msra.mxu0 %v840
        %858 = vmatprep.subr.bf16.mxu0 0
        %859 = vmatpush2.bf16.xpose.msra.mxu0 0
        %860 = vmatprep.subr.bf16.mxu0 0
        %861 = vmatpush2.bf16.xpose.msra.mxu0 0
        %862 = vmatprep.subr.bf16.mxu0 0
        %863 = vmatpush2.bf16.xpose.msra.mxu0 0
        %864 = vmatprep.subr.bf16.mxu0 0
        %865 = vmatpush2.bf16.xpose.msra.mxu0 0
        %866 = vmatprep.subr.bf16.mxu0 0
        %867 = vmatpush2.bf16.xpose.msra.mxu0 0
        %868 = vmatprep.subr.bf16.mxu0 0
        %869 = vmatpush2.bf16.xpose.msra.mxu0 0
        %870 = vmatprep.subr.bf16.mxu0 0
        %871 = vmatpush2.bf16.xpose.msra.mxu0 0
        %872 = vmatprep.subr.bf16.mxu0 0
        %873 = vmatpush2.bf16.xpose.msra.mxu0 0
        %874 = vmatprep.mubr.bf16.mxu0 0
        %875 = vmatmul.mubr.bf16.gmra.mxu0 %v837
        %v876 = vpop.f32.mrf.mxu0
        %v877 = vadd.f32 0.0, %v876
        %v878 = vpop.f32.mrf.mxu0
        %v879 = vpop.f32.mrf.mxu0
        %v880 = vpop.f32.mrf.mxu0
        %881 = vdwg.mxu0
        %v882 = vmul.f32 %v877, 0.35355338
        %v883 = vsel %vm511, -1e+30, %v882
        %v884 = vsel %vm512, %v883, -inf
        %885 = vmax.xlane.f32.xlu0 %v884
        %v886 = vpop.xlane.xlu0 %885
        %v887 = vsub.f32 %v883, %v886
        %v888 = vmul.f32 %v887, 1.442695
        %v889 = vpow.pop %v888
        %v890 = vsel %vm512, %v889, 0.0
        %891 = vadd.xlane.f32.xlu0 %v890
        %v892 = vpop.xlane.xlu0 %891
        %v893 = vrcp.pop %v892
        %v894 = vmul.f32 %v889, %v893
        %v895 = vpack.c.bf16 %v894, %v894
        %896 = vrot.lane.b32.xlu0 %v504, 80
        %v897 = vpop.permute.xlu0 %896
        %v899 = vsel %vm512, %v895, 0
        %v902 = vsel %vm579, %v897, 0
        %904 = vmatprep.subr.bf16.mxu0 0
        %905 = vmatpush1.bf16.msra.mxu0 0
        %906 = vmatprep.subr.bf16.mxu0 0
        %907 = vmatpush1.bf16.msra.mxu0 0
        %908 = vmatprep.subr.bf16.mxu0 0
        %909 = vmatpush1.bf16.msra.mxu0 0
        %910 = vmatprep.subr.bf16.mxu0 0
        %911 = vmatpush1.bf16.msra.mxu0 0
        %912 = vmatprep.subr.bf16.mxu0 0
        %913 = vmatpush1.bf16.msra.mxu0 0
        %914 = vmatprep.subr.bf16.mxu0 0
        %915 = vmatpush1.bf16.msra.mxu0 0
        %916 = vmatprep.subr.bf16.mxu0 0
        %917 = vmatpush1.bf16.msra.mxu0 0
        %918 = vmatprep.subr.bf16.mxu0 0
        %919 = vmatpush1.bf16.msra.mxu0 %v902
        %920 = vmatprep.subr.bf16.mxu0 0
        %921 = vmatpush2.bf16.msra.mxu0 0
        %922 = vmatprep.subr.bf16.mxu0 0
        %923 = vmatpush2.bf16.msra.mxu0 0
        %924 = vmatprep.subr.bf16.mxu0 0
        %925 = vmatpush2.bf16.msra.mxu0 0
        %926 = vmatprep.subr.bf16.mxu0 0
        %927 = vmatpush2.bf16.msra.mxu0 0
        %928 = vmatprep.subr.bf16.mxu0 0
        %929 = vmatpush2.bf16.msra.mxu0 0
        %930 = vmatprep.subr.bf16.mxu0 0
        %931 = vmatpush2.bf16.msra.mxu0 0
        %932 = vmatprep.subr.bf16.mxu0 0
        %933 = vmatpush2.bf16.msra.mxu0 0
        %934 = vmatprep.subr.bf16.mxu0 0
        %935 = vmatpush2.bf16.msra.mxu0 0
        %936 = vmatprep.mubr.bf16.mxu0 0
        %937 = vmatmul.mubr.bf16.gmra.mxu0 %v899
        %v938 = vpop.f32.mrf.mxu0
        %v939 = vadd.f32 0.0, %v938
        %v940 = vpop.f32.mrf.mxu0
        %v941 = vpop.f32.mrf.mxu0
        %v942 = vpop.f32.mrf.mxu0
        %943 = vdwg.mxu0
        %v944 = vpack.c.bf16 %v939, %v939
        %v946 = vsel %vm512, %v944, 0
        %v949 = vsel %vm579, %v501, 0
        %951 = vmatprep.subr.bf16.mxu0 0
        %952 = vmatpush1.bf16.msra.mxu0 0
        %953 = vmatprep.subr.bf16.mxu0 0
        %954 = vmatpush1.bf16.msra.mxu0 0
        %955 = vmatprep.subr.bf16.mxu0 0
        %956 = vmatpush1.bf16.msra.mxu0 0
        %957 = vmatprep.subr.bf16.mxu0 0
        %958 = vmatpush1.bf16.msra.mxu0 0
        %959 = vmatprep.subr.bf16.mxu0 0
        %960 = vmatpush1.bf16.msra.mxu0 0
        %961 = vmatprep.subr.bf16.mxu0 0
        %962 = vmatpush1.bf16.msra.mxu0 0
        %963 = vmatprep.subr.bf16.mxu0 0
        %964 = vmatpush1.bf16.msra.mxu0 0
        %965 = vmatprep.subr.bf16.mxu0 0
        %966 = vmatpush1.bf16.msra.mxu0 %v949
        %967 = vmatprep.subr.bf16.mxu0 0
        %968 = vmatpush2.bf16.msra.mxu0 0
        %969 = vmatprep.subr.bf16.mxu0 0
        %970 = vmatpush2.bf16.msra.mxu0 0
        %971 = vmatprep.subr.bf16.mxu0 0
        %972 = vmatpush2.bf16.msra.mxu0 0
        %973 = vmatprep.subr.bf16.mxu0 0
        %974 = vmatpush2.bf16.msra.mxu0 0
        %975 = vmatprep.subr.bf16.mxu0 0
        %976 = vmatpush2.bf16.msra.mxu0 0
        %977 = vmatprep.subr.bf16.mxu0 0
        %978 = vmatpush2.bf16.msra.mxu0 0
        %979 = vmatprep.subr.bf16.mxu0 0
        %980 = vmatpush2.bf16.msra.mxu0 0
        %981 = vmatprep.subr.bf16.mxu0 0
        %982 = vmatpush2.bf16.msra.mxu0 0
        %983 = vmatprep.mubr.bf16.mxu0 0
        %984 = vmatmul.mubr.bf16.gmra.mxu0 %v946
        %v985 = vpop.f32.mrf.mxu0
        %v986 = vadd.f32 0.0, %v985
        %v987 = vpop.f32.mrf.mxu0
        %v988 = vpop.f32.mrf.mxu0
        %v989 = vpop.f32.mrf.mxu0
        %990 = vdwg.mxu0
        %v991 = vadd.f32 %v831, %v986
        %992 = vrot.lane.b32.xlu0 %v503, 104
        %v993 = vpop.permute.xlu0 %992
        %994 = vrot.lane.b32.xlu0 %v504, 104
        %v995 = vpop.permute.xlu0 %994
        %v997 = vsel %vm512, %v993, 0
        %v1000 = vsel %vm512, %v995, 0
        %1002 = vmatprep.subr.bf16.mxu0 0
        %1003 = vmatpush1.bf16.xpose.msra.mxu0 0
        %1004 = vmatprep.subr.bf16.mxu0 0
        %1005 = vmatpush1.bf16.xpose.msra.mxu0 0
        %1006 = vmatprep.subr.bf16.mxu0 0
        %1007 = vmatpush1.bf16.xpose.msra.mxu0 0
        %1008 = vmatprep.subr.bf16.mxu0 0
        %1009 = vmatpush1.bf16.xpose.msra.mxu0 0
        %1010 = vmatprep.subr.bf16.mxu0 0
        %1011 = vmatpush1.bf16.xpose.msra.mxu0 0
        %1012 = vmatprep.subr.bf16.mxu0 0
        %1013 = vmatpush1.bf16.xpose.msra.mxu0 0
        %1014 = vmatprep.subr.bf16.mxu0 0
        %1015 = vmatpush1.bf16.xpose.msra.mxu0 0
        %1016 = vmatprep.subr.bf16.mxu0 0
        %1017 = vmatpush1.bf16.xpose.msra.mxu0 %v1000
        %1018 = vmatprep.subr.bf16.mxu0 0
        %1019 = vmatpush2.bf16.xpose.msra.mxu0 0
        %1020 = vmatprep.subr.bf16.mxu0 0
        %1021 = vmatpush2.bf16.xpose.msra.mxu0 0
        %1022 = vmatprep.subr.bf16.mxu0 0
        %1023 = vmatpush2.bf16.xpose.msra.mxu0 0
        %1024 = vmatprep.subr.bf16.mxu0 0
        %1025 = vmatpush2.bf16.xpose.msra.mxu0 0
        %1026 = vmatprep.subr.bf16.mxu0 0
        %1027 = vmatpush2.bf16.xpose.msra.mxu0 0
        %1028 = vmatprep.subr.bf16.mxu0 0
        %1029 = vmatpush2.bf16.xpose.msra.mxu0 0
        %1030 = vmatprep.subr.bf16.mxu0 0
        %1031 = vmatpush2.bf16.xpose.msra.mxu0 0
        %1032 = vmatprep.subr.bf16.mxu0 0
        %1033 = vmatpush2.bf16.xpose.msra.mxu0 0
        %1034 = vmatprep.mubr.bf16.mxu0 0
        %1035 = vmatmul.mubr.bf16.gmra.mxu0 %v997
        %v1036 = vpop.f32.mrf.mxu0
        %v1037 = vadd.f32 0.0, %v1036
        %v1038 = vpop.f32.mrf.mxu0
        %v1039 = vpop.f32.mrf.mxu0
        %v1040 = vpop.f32.mrf.mxu0
        %1041 = vdwg.mxu0
        %v1042 = vmul.f32 %v1037, 0.35355338
        %v1043 = vsel %vm511, -1e+30, %v1042
        %v1044 = vsel %vm512, %v1043, -inf
        %1045 = vmax.xlane.f32.xlu0 %v1044
        %v1046 = vpop.xlane.xlu0 %1045
        %v1047 = vsub.f32 %v1043, %v1046
        %v1048 = vmul.f32 %v1047, 1.442695
        %v1049 = vpow.pop %v1048
        %v1050 = vsel %vm512, %v1049, 0.0
        %1051 = vadd.xlane.f32.xlu0 %v1050
        %v1052 = vpop.xlane.xlu0 %1051
        %v1053 = vrcp.pop %v1052
        %v1054 = vmul.f32 %v1049, %v1053
        %v1055 = vpack.c.bf16 %v1054, %v1054
        %1056 = vrot.lane.b32.xlu0 %v504, 72
        %v1057 = vpop.permute.xlu0 %1056
        %v1059 = vsel %vm512, %v1055, 0
        %v1062 = vsel %vm579, %v1057, 0
        %1064 = vmatprep.subr.bf16.mxu0 0
        %1065 = vmatpush1.bf16.msra.mxu0 0
        %1066 = vmatprep.subr.bf16.mxu0 0
        %1067 = vmatpush1.bf16.msra.mxu0 0
        %1068 = vmatprep.subr.bf16.mxu0 0
        %1069 = vmatpush1.bf16.msra.mxu0 0
        %1070 = vmatprep.subr.bf16.mxu0 0
        %1071 = vmatpush1.bf16.msra.mxu0 0
        %1072 = vmatprep.subr.bf16.mxu0 0
        %1073 = vmatpush1.bf16.msra.mxu0 0
        %1074 = vmatprep.subr.bf16.mxu0 0
        %1075 = vmatpush1.bf16.msra.mxu0 0
        %1076 = vmatprep.subr.bf16.mxu0 0
        %1077 = vmatpush1.bf16.msra.mxu0 0
        %1078 = vmatprep.subr.bf16.mxu0 0
        %1079 = vmatpush1.bf16.msra.mxu0 %v1062
        %1080 = vmatprep.subr.bf16.mxu0 0
        %1081 = vmatpush2.bf16.msra.mxu0 0
        %1082 = vmatprep.subr.bf16.mxu0 0
        %1083 = vmatpush2.bf16.msra.mxu0 0
        %1084 = vmatprep.subr.bf16.mxu0 0
        %1085 = vmatpush2.bf16.msra.mxu0 0
        %1086 = vmatprep.subr.bf16.mxu0 0
        %1087 = vmatpush2.bf16.msra.mxu0 0
        %1088 = vmatprep.subr.bf16.mxu0 0
        %1089 = vmatpush2.bf16.msra.mxu0 0
        %1090 = vmatprep.subr.bf16.mxu0 0
        %1091 = vmatpush2.bf16.msra.mxu0 0
        %1092 = vmatprep.subr.bf16.mxu0 0
        %1093 = vmatpush2.bf16.msra.mxu0 0
        %1094 = vmatprep.subr.bf16.mxu0 0
        %1095 = vmatpush2.bf16.msra.mxu0 0
        %1096 = vmatprep.mubr.bf16.mxu0 0
        %1097 = vmatmul.mubr.bf16.gmra.mxu0 %v1059
        %v1098 = vpop.f32.mrf.mxu0
        %v1099 = vadd.f32 0.0, %v1098
        %v1100 = vpop.f32.mrf.mxu0
        %v1101 = vpop.f32.mrf.mxu0
        %v1102 = vpop.f32.mrf.mxu0
        %1103 = vdwg.mxu0
        %v1104 = vpack.c.bf16 %v1099, %v1099
        %v1106 = vsel %vm512, %v1104, 0
        %v1109 = vsel %vm579, %v502, 0
        %1111 = vmatprep.subr.bf16.mxu0 0
        %1112 = vmatpush1.bf16.msra.mxu0 0
        %1113 = vmatprep.subr.bf16.mxu0 0
        %1114 = vmatpush1.bf16.msra.mxu0 0
        %1115 = vmatprep.subr.bf16.mxu0 0
        %1116 = vmatpush1.bf16.msra.mxu0 0
        %1117 = vmatprep.subr.bf16.mxu0 0
        %1118 = vmatpush1.bf16.msra.mxu0 0
        %1119 = vmatprep.subr.bf16.mxu0 0
        %1120 = vmatpush1.bf16.msra.mxu0 0
        %1121 = vmatprep.subr.bf16.mxu0 0
        %1122 = vmatpush1.bf16.msra.mxu0 0
        %1123 = vmatprep.subr.bf16.mxu0 0
        %1124 = vmatpush1.bf16.msra.mxu0 0
        %1125 = vmatprep.subr.bf16.mxu0 0
        %1126 = vmatpush1.bf16.msra.mxu0 %v1109
        %1127 = vmatprep.subr.bf16.mxu0 0
        %1128 = vmatpush2.bf16.msra.mxu0 0
        %1129 = vmatprep.subr.bf16.mxu0 0
        %1130 = vmatpush2.bf16.msra.mxu0 0
        %1131 = vmatprep.subr.bf16.mxu0 0
        %1132 = vmatpush2.bf16.msra.mxu0 0
        %1133 = vmatprep.subr.bf16.mxu0 0
        %1134 = vmatpush2.bf16.msra.mxu0 0
        %1135 = vmatprep.subr.bf16.mxu0 0
        %1136 = vmatpush2.bf16.msra.mxu0 0
        %1137 = vmatprep.subr.bf16.mxu0 0
        %1138 = vmatpush2.bf16.msra.mxu0 0
        %1139 = vmatprep.subr.bf16.mxu0 0
        %1140 = vmatpush2.bf16.msra.mxu0 0
        %1141 = vmatprep.subr.bf16.mxu0 0
        %1142 = vmatpush2.bf16.msra.mxu0 0
        %1143 = vmatprep.mubr.bf16.mxu0 0
        %1144 = vmatmul.mubr.bf16.gmra.mxu0 %v1106
        %v1145 = vpop.f32.mrf.mxu0
        %v1146 = vadd.f32 0.0, %v1145
        %v1147 = vpop.f32.mrf.mxu0
        %v1148 = vpop.f32.mrf.mxu0
        %v1149 = vpop.f32.mrf.mxu0
        %1150 = vdwg.mxu0
        %v1151 = vadd.f32 %v991, %v1146
        %v1152 = vld [vmem:[%s5] sm:$0x1]
        %v1153 = vld [vmem:[%s6] sm:$0x1]
        %v1154 = vsel %vm446, %v1151, 0.0
        %1155 = vadd.xlane.f32.xlu0 %v1154
        %v1156 = vpop.xlane.xlu0 %1155
        %v1157 = vrcp.pop 32.0
        %v1158 = vmul.f32 %v1156, %v1157
        %v1159 = vsub.f32 %v1151, %v1158
        %v1160 = vmul.f32 %v1159, %v1159
        %v1161 = vsel %vm446, %v1160, 0.0
        %1162 = vadd.xlane.f32.xlu0 %v1161
        %v1163 = vpop.xlane.xlu0 %1162
        %v1164 = vmul.f32 %v1163, %v1157
        %v1165 = vadd.f32 %v1164, 1e-05
        %v1166 = vrsqrt.pop %v1165
        %v1167 = vmul.f32 %v1159, %v1166
        %v1169 = vlaneseq
        %v1170 = vshrl.u32 %v1169, 7
        %v1171 = vsub.s32 0, %v1170
        %v1172 = vrot.slane %v1152, %v1171
        %v1174 = vmul.f32 %v1167, %v1172
        %v1176 = vlaneseq
        %v1177 = vshrl.u32 %v1176, 7
        %v1178 = vsub.s32 0, %v1177
        %v1179 = vrot.slane %v1153, %v1178
        %v1181 = vadd.f32 %v1174, %v1179
        %1182 = vst.msk [vmem:[%s336] sm:$0xff] %vm446, %v1181
        %s1183 = sand.u32 %s199, 1
        %s1184 = scalar_lea.sflag [#allocation5], %s1183
        %s1185 = sand.u32 %s199, 1
        %s1186 = smul.addr %s1185, 8
        %s1187 = scalar_lea.vmem [#allocation9], %s1186
        // Predicated region
        $region65: #{tpu_custom_call.1} parent=47 // pred_check
          %p1188 = pneg %p209
        $region66: #{tpu_custom_call.1} parent=47 // pred_check_branch
          %1190 = sbr.rel (%p1188) target = $region68
        $region67: #{tpu_custom_call.1} parent=47 // pred_region
          %s1192 = ssub.s32 128, 128
          %1193 = vsyncadd %s1184, %s1192
          %s1194 = sadd.s32 %s30, %s29
          %s1195 = smul.addr %s1194, 128
          %s1196 = scalar_lea.hbm %s7, %s1195
          %s1198 = sshll.u32 %s1187, 4
          %s1199 = int_to_ptr.vmem [resolvable:$true] %s1198
          %1201 = dma.vmem_to_hbm [thread:$0]  %s1199, 128, %s1196, %s1184
        $region68: #{tpu_custom_call.1} parent=47 // pred_fallthru
          _
      $region48: #{tpu_custom_call.1} parent=5 // pred_fallthru
        _
      %p1202 = scmp.le.s32.totalorder 2, %s20
      // Predicated region
      $region69: #{tpu_custom_call.1} parent=5 // pred_check
        %p1203 = pneg %p1202
      $region70: #{tpu_custom_call.1} parent=5 // pred_check_branch
        %1205 = sbr.rel (%p1203) target = $region72
      $region71: #{tpu_custom_call.1} parent=5 // pred_region
        %s1206 = ssub.s32 %s20, 2
        // Predicated region
        $region73: #{tpu_custom_call.1} parent=71 // pred_check
          %p1207 = pneg %p215
        $region74: #{tpu_custom_call.1} parent=71 // pred_check_branch
          %1209 = sbr.rel (%p1207) target = $region76
        $region75: #{tpu_custom_call.1} parent=71 // pred_region
          %s1210 = sand.u32 %s200, 1
          %s1211 = scalar_lea.sflag [#allocation5], %s1210
          %s1212 = sand.u32 %s200, 1
          %s1213 = smul.addr %s1212, 8
          %s1214 = scalar_lea.vmem [#allocation9], %s1213
          %1215 = dma.done %s1211, 128
        $region76: #{tpu_custom_call.1} parent=71 // pred_fallthru
          _
      $region72: #{tpu_custom_call.1} parent=5 // pred_fallthru
        _
    $region6: #{tpu_custom_call.1} parent=1 // loop_footer
      %s24 = sadd.s32 1, %s20
    $region7: #{tpu_custom_call.1} parent=1 // loop_footer_branch
      %19 = sbr.rel target = $region3
    $region8: #{tpu_custom_call.1} parent=1 // loop_exit
      _
    %1216 = vsyncpa [#allocation4], 1
    %s1217 = scalar_lea.sflag [#allocation4], 1
    %1218 = vsyncpa %s1217, 1
    %1219 = vsyncpa [#allocation7], 1
    %1220 = vsyncpa [#allocation5], 1
    %s1221 = scalar_lea.sflag [#allocation5], 1
    %1222 = vsyncpa %s1221, 1

</llo_original>
